<compile_context>
chip_gen: v7x
topology: tpu7x:2x2x1
jax: 0.10.0
libtpu: 0.0.40
codegen_flags: <defaults>
</compile_context>

<pallas_src>
import functools
import math

import jax
import jax.numpy as jnp
from jax.experimental import pallas as pl
from jax.experimental.pallas import tpu as pltpu

LN_EPS = 1e-5  # nn.LayerNorm default


def _layernorm(x):
    # nn.LayerNorm(d_model) created fresh in forward => gamma=1, beta=0, biased variance.
    mean = jnp.mean(x, axis=-1, keepdims=True)
    var = jnp.mean((x - mean) ** 2, axis=-1, keepdims=True)
    return (x - mean) * jax.lax.rsqrt(var + LN_EPS)


def _encoder_kernel(x_ref, wqkv_ref, wfc_ref, w1_ref, w2_ref,
                    out_ref, attn_ref, act_ref, *, n_heads, d_k, d_v):
    l = pl.program_id(1)
    n_layers = pl.num_programs(1)

    # Layer 0 of each batch element: load the input activation into the VMEM carry.
    @pl.when(l == 0)
    def _():
        act_ref[...] = x_ref[...]

    x = act_ref[...]                          # [S, D] f32 activation for this layer
    S, D = x.shape
    x_b = x.astype(jnp.bfloat16)

    # Fused Q/K/V projection: one wide bf16 MXU matmul, f32 accumulation.
    qkv = jnp.dot(x_b, wqkv_ref[...], preferred_element_type=jnp.float32)  # [S, H*(2dk+dv)]
    hdk = n_heads * d_k
    q = qkv[:, :hdk]
    k = qkv[:, hdk:2 * hdk]
    v = qkv[:, 2 * hdk:]

    scale = 1.0 / math.sqrt(d_k)
    wfc = wfc_ref[...]                        # [H*d_v, D] bf16
    mha = jnp.zeros((S, D), jnp.float32)
    dn_qk = (((1,), (1,)), ((), ()))          # q @ k^T (contract last dims)

    # Heads unrolled statically (small H). TODO(synk): use lax.fori_loop / grid axis for H >= 8.
    for h in range(n_heads):
        qh = q[:, h * d_k:(h + 1) * d_k].astype(jnp.bfloat16)     # [S, d_k]
        kh = k[:, h * d_k:(h + 1) * d_k].astype(jnp.bfloat16)     # [S, d_k]
        vh = v[:, h * d_v:(h + 1) * d_v].astype(jnp.bfloat16)     # [S, d_v]
        scores = jax.lax.dot_general(qh, kh, dn_qk,
                                     preferred_element_type=jnp.float32) * scale  # [S, S]
        m = jnp.max(scores, axis=-1, keepdims=True)
        e = jnp.exp(scores - m)
        p = e * pl.reciprocal(jnp.sum(e, axis=-1, keepdims=True), approx=True)     # softmax
        attn_ref[:, h * S:(h + 1) * S] = p                        # lane-packed [S, H*S] slab
        ctx_h = jnp.dot(p.astype(jnp.bfloat16), vh,
                        preferred_element_type=jnp.float32)       # [S, d_v]
        # Accumulate directly into the [S, D] output projection (no concat of d_v tiles).
        mha = mha + jnp.dot(ctx_h.astype(jnp.bfloat16),
                            wfc[h * d_v:(h + 1) * d_v, :],
                            preferred_element_type=jnp.float32)

    y = _layernorm(mha + x)                                       # residual + LN (f32)

    ff = jnp.maximum(jnp.dot(y.astype(jnp.bfloat16), w1_ref[...],
                             preferred_element_type=jnp.float32), 0.0)  # [S, d_ff]
    ff2 = jnp.dot(ff.astype(jnp.bfloat16), w2_ref[...],
                  preferred_element_type=jnp.float32)                    # [S, D]
    z = _layernorm(ff2 + y)

    act_ref[...] = z                          # carry to next layer (stays in VMEM)

    @pl.when(l == n_layers - 1)
    def _():
        out_ref[...] = z


def encoder_forward(x, layer_params, *, n_heads, d_k, d_v):
    """x: [B, S, D] f32. layer_params: list of (wq, wk, wv, wfc, w1, w2) f32 arrays."""
    B, S, D = x.shape
    L = len(layer_params)
    # Stack per-layer weights; fuse wq|wk|wv; store in HBM as bf16.
    wqkv = jnp.stack([jnp.concatenate([p[0], p[1], p[2]], axis=-1)
                      for p in layer_params]).astype(jnp.bfloat16)   # [L, D, H*(2dk+dv)]
    wfc = jnp.stack([p[3] for p in layer_params]).astype(jnp.bfloat16)  # [L, H*dv, D]
    w1 = jnp.stack([p[4] for p in layer_params]).astype(jnp.bfloat16)   # [L, D, d_ff]
    w2 = jnp.stack([p[5] for p in layer_params]).astype(jnp.bfloat16)   # [L, d_ff, D]
    d_ff = w1.shape[-1]
    dqkv = wqkv.shape[-1]

    kernel = functools.partial(_encoder_kernel, n_heads=n_heads, d_k=d_k, d_v=d_v)
    out, attn_raw = pl.pallas_call(
        kernel,
        out_shape=(
            jax.ShapeDtypeStruct((B, S, D), jnp.float32),
            jax.ShapeDtypeStruct((B, L, S, n_heads * S), jnp.float32),
        ),
        grid=(B, L),  # layer axis innermost
        in_specs=[
            pl.BlockSpec((None, S, D), lambda b, l: (b, 0, 0)),
            pl.BlockSpec((None, D, dqkv), lambda b, l: (l, 0, 0)),
            pl.BlockSpec((None, n_heads * d_v, D), lambda b, l: (l, 0, 0)),
            pl.BlockSpec((None, D, d_ff), lambda b, l: (l, 0, 0)),
            pl.BlockSpec((None, d_ff, D), lambda b, l: (l, 0, 0)),
        ],
        out_specs=(
            pl.BlockSpec((None, S, D), lambda b, l: (b, 0, 0)),
            pl.BlockSpec((None, None, S, n_heads * S), lambda b, l: (b, l, 0, 0)),
        ),
        scratch_shapes=[pltpu.VMEM((S, D), jnp.float32)],  # activation carried across layers
        compiler_params=pltpu.CompilerParams(
            dimension_semantics=("parallel", "arbitrary")),
    )(x, wqkv, wfc, w1, w2)

    # attn_raw[b, l, s, h*S + kk] == attn[b, l, h, s, kk]; reshape to module layout.
    attns = [attn_raw[:, l].reshape(B, S, n_heads, S).transpose(0, 2, 1, 3)
             for l in range(L)]
    return out, attns


# ----- pure-JAX reference (same bf16-operand / f32-accumulate numerics) -----
def _ref_layer(x, wq, wk, wv, wfc, w1, w2, *, n_heads, d_k, d_v):
    B, S, D = x.shape
    bf, f32 = jnp.bfloat16, jnp.float32
    xb = x.astype(bf)
    q = jnp.einsum("bsd,de->bse", xb, wq.astype(bf), preferred_element_type=f32)
    k = jnp.einsum("bsd,de->bse", xb, wk.astype(bf), preferred_element_type=f32)
    v = jnp.einsum("bsd,de->bse", xb, wv.astype(bf), preferred_element_type=f32)
    q = q.reshape(B, S, n_heads, d_k).transpose(0, 2, 1, 3)
    k = k.reshape(B, S, n_heads, d_k).transpose(0, 2, 1, 3)
    v = v.reshape(B, S, n_heads, d_v).transpose(0, 2, 1, 3)
    scores = jnp.einsum("bhqd,bhkd->bhqk", q.astype(bf), k.astype(bf),
                        preferred_element_type=f32) / math.sqrt(d_k)
    attn = jax.nn.softmax(scores, axis=-1)
    ctx = jnp.einsum("bhqk,bhkd->bhqd", attn.astype(bf), v.astype(bf),
                     preferred_element_type=f32)
    ctx = ctx.transpose(0, 2, 1, 3).reshape(B, S, n_heads * d_v)
    y = _layernorm(jnp.einsum("bsd,de->bse", ctx.astype(bf), wfc.astype(bf),
                              preferred_element_type=f32) + x)
    h = jnp.maximum(jnp.einsum("bsd,df->bsf", y.astype(bf), w1.astype(bf),
                               preferred_element_type=f32), 0.0)
    out = _layernorm(jnp.einsum("bsf,fd->bsd", h.astype(bf), w2.astype(bf),
                                preferred_element_type=f32) + y)
    return out, attn


def _init_linear(key, fan_in, fan_out):
    # matches nn.Linear default: U(-1/sqrt(fan_in), 1/sqrt(fan_in)); stored as [in, out]
    bound = 1.0 / math.sqrt(fan_in)
    return jax.random.uniform(key, (fan_in, fan_out), jnp.float32, -bound, bound)


if __name__ == "__main__":
    # small shapes consistent with the module
    B, S = 2, 8
    d_model, d_ff, d_k, d_v, n_heads, n_layers = 32, 64, 8, 8, 4, 2

    key = jax.random.PRNGKey(0)
    key, xk = jax.random.split(key)
    x = jax.random.normal(xk, (B, S, d_model), jnp.float32)

    layer_params = []
    for _ in range(n_layers):
        key, *ks = jax.random.split(key, 7)
        wq = _init_linear(ks[0], d_model, d_k * n_heads)
        wk = _init_linear(ks[1], d_model, d_k * n_heads)
        wv = _init_linear(ks[2], d_model, d_v * n_heads)
        wfc = _init_linear(ks[3], n_heads * d_v, d_model)
        w1 = _init_linear(ks[4], d_model, d_ff)
        w2 = _init_linear(ks[5], d_ff, d_model)
        layer_params.append((wq, wk, wv, wfc, w1, w2))

    out, attns = encoder_forward(x, layer_params, n_heads=n_heads, d_k=d_k, d_v=d_v)
    out = jax.block_until_ready(out)
    attns = [jax.block_until_ready(a) for a in attns]

    # verify against pure-JAX reference (tolerance relaxed for bf16 MXU operands)
    ref = x
    for p, a_kernel in zip(layer_params, attns):
        ref, a_ref = _ref_layer(ref, *p, n_heads=n_heads, d_k=d_k, d_v=d_v)
        assert a_kernel.shape == a_ref.shape
        assert jnp.allclose(a_kernel, a_ref, atol=2e-2, rtol=2e-2)
    assert jnp.allclose(out, ref, atol=2e-2, rtol=2e-2)

    print("KERNEL_OK")
</pallas_src>

<mosaic_0001>
module attributes {stable_mosaic.version = 11 : i64} {
  func.func @_encoder_kernel(%arg0: i32, %arg1: i32, %arg2: memref<1x8x32xf32, #tpu.memory_space<vmem>>, %arg3: memref<1x32x96xbf16, #tpu.memory_space<vmem>>, %arg4: memref<1x32x32xbf16, #tpu.memory_space<vmem>>, %arg5: memref<1x32x64xbf16, #tpu.memory_space<vmem>>, %arg6: memref<1x64x32xbf16, #tpu.memory_space<vmem>>, %arg7: memref<1x8x32xf32, #tpu.memory_space<vmem>>, %arg8: memref<1x1x8x32xf32, #tpu.memory_space<vmem>>, %arg9: memref<8x32xf32, #tpu.memory_space<vmem>>) attributes {dimension_semantics = [#tpu.dimension_semantics<parallel>, #tpu.dimension_semantics<arbitrary>], iteration_bounds = array<i64: 2, 2>, scalar_prefetch = 0 : i64, scratch_operands = 1 : i64, tpu.core_type = #tpu.core_type<tc>, window_params = [{transform_indices = @transform_0, window_bounds = array<i64: 1, 8, 32>}, {transform_indices = @transform_1, window_bounds = array<i64: 1, 32, 96>}, {transform_indices = @transform_2, window_bounds = array<i64: 1, 32, 32>}, {transform_indices = @transform_3, window_bounds = array<i64: 1, 32, 64>}, {transform_indices = @transform_4, window_bounds = array<i64: 1, 64, 32>}, {transform_indices = @transform_5, window_bounds = array<i64: 1, 8, 32>}, {transform_indices = @transform_6, window_bounds = array<i64: 1, 1, 8, 32>}]} {
    %c0_i32 = arith.constant 0 : i32
    %0 = arith.cmpi eq, %arg1, %c0_i32 : i32
    %1 = arith.extui %0 : i1 to i32
    %c0_i32_0 = arith.constant 0 : i32
    %2 = arith.cmpi ne, %1, %c0_i32_0 : i32
    scf.if %2 {
      %c0_68 = arith.constant 0 : index
      %c0_69 = arith.constant 0 : index
      %c0_70 = arith.constant 0 : index
      %178 = vector.load %arg2[%c0_68, %c0_69, %c0_70] : memref<1x8x32xf32, #tpu.memory_space<vmem>>, vector<1x8x32xf32>
      %179 = vector.shape_cast %178 : vector<1x8x32xf32> to vector<8x32xf32>
      %c0_71 = arith.constant 0 : index
      %c0_72 = arith.constant 0 : index
      %180 = vector.load %arg9[%c0_71, %c0_72] : memref<8x32xf32, #tpu.memory_space<vmem>>, vector<8x32xf32>
      tpu.vector_store %arg9[%c0_71, %c0_72], %179 {strides = array<i32>} : memref<8x32xf32, #tpu.memory_space<vmem>>, vector<8x32xf32>,
    } else {
    }
    %c0 = arith.constant 0 : index
    %c0_1 = arith.constant 0 : index
    %3 = vector.load %arg9[%c0, %c0_1] : memref<8x32xf32, #tpu.memory_space<vmem>>, vector<8x32xf32>
    %4 = arith.truncf %3 : vector<8x32xf32> to vector<8x32xbf16>
    %c0_2 = arith.constant 0 : index
    %c0_3 = arith.constant 0 : index
    %c0_4 = arith.constant 0 : index
    %5 = vector.load %arg3[%c0_2, %c0_3, %c0_4] : memref<1x32x96xbf16, #tpu.memory_space<vmem>>, vector<1x32x96xbf16>
    %6 = vector.shape_cast %5 : vector<1x32x96xbf16> to vector<32x96xbf16>
    %cst = arith.constant dense<0.000000e+00> : vector<8x96xf32>
    %7 = tpu.matmul %4, %6, %cst {dimension_numbers = #tpu.dot_dimension_numbers<[1], [0], [0], [1], [0, 0, 1, 1], [], []>} : vector<8x32xbf16>, vector<32x96xbf16>, vector<8x96xf32> -> vector<8x96xf32>
    %8 = vector.extract_strided_slice %7 {offsets = [0, 0], sizes = [8, 32], strides = [1, 1]} : vector<8x96xf32> to vector<8x32xf32>
    %9 = vector.extract_strided_slice %7 {offsets = [0, 32], sizes = [8, 32], strides = [1, 1]} : vector<8x96xf32> to vector<8x32xf32>
    %10 = vector.extract_strided_slice %7 {offsets = [0, 64], sizes = [8, 32], strides = [1, 1]} : vector<8x96xf32> to vector<8x32xf32>
    %c0_5 = arith.constant 0 : index
    %c0_6 = arith.constant 0 : index
    %c0_7 = arith.constant 0 : index
    %11 = vector.load %arg4[%c0_5, %c0_6, %c0_7] : memref<1x32x32xbf16, #tpu.memory_space<vmem>>, vector<1x32x32xbf16>
    %12 = vector.shape_cast %11 : vector<1x32x32xbf16> to vector<32x32xbf16>
    %cst_8 = arith.constant 0.000000e+00 : f32
    %13 = vector.broadcast %cst_8 : f32 to vector<8x32xf32>
    %14 = vector.extract_strided_slice %8 {offsets = [0, 0], sizes = [8, 8], strides = [1, 1]} : vector<8x32xf32> to vector<8x8xf32>
    %15 = arith.truncf %14 : vector<8x8xf32> to vector<8x8xbf16>
    %16 = vector.extract_strided_slice %9 {offsets = [0, 0], sizes = [8, 8], strides = [1, 1]} : vector<8x32xf32> to vector<8x8xf32>
    %17 = arith.truncf %16 : vector<8x8xf32> to vector<8x8xbf16>
    %18 = vector.extract_strided_slice %10 {offsets = [0, 0], sizes = [8, 8], strides = [1, 1]} : vector<8x32xf32> to vector<8x8xf32>
    %19 = arith.truncf %18 : vector<8x8xf32> to vector<8x8xbf16>
    %cst_9 = arith.constant dense<0.000000e+00> : vector<8x8xf32>
    %20 = tpu.matmul %15, %17, %cst_9 {dimension_numbers = #tpu.dot_dimension_numbers<[1], [1], [0], [0], [0, 0, 1, 0], [], []>} : vector<8x8xbf16>, vector<8x8xbf16>, vector<8x8xf32> -> vector<8x8xf32>
    %cst_10 = arith.constant 0.353553385 : f32
    %21 = vector.broadcast %cst_10 : f32 to vector<8x8xf32>
    %22 = arith.mulf %20, %21 : vector<8x8xf32>
    %cst_11 = arith.constant dense<0xFF800000> : vector<8xf32>
    %23 = vector.multi_reduction <maximumf>, %22, %cst_11 [1] : vector<8x8xf32> to vector<8xf32>
    %24 = vector.shape_cast %23 : vector<8xf32> to vector<8x1xf32>
    %25 = vector.broadcast %24 : vector<8x1xf32> to vector<8x8xf32>
    %26 = arith.subf %22, %25 : vector<8x8xf32>
    %27 = math.exp %26 : vector<8x8xf32>
    %cst_12 = arith.constant dense<0.000000e+00> : vector<8xf32>
    %28 = vector.multi_reduction <add>, %27, %cst_12 [1] : vector<8x8xf32> to vector<8xf32>
    %29 = vector.shape_cast %28 : vector<8xf32> to vector<8x1xf32>
    %30 = tpu.reciprocal %29 {approx = true} : vector<8x1xf32> -> vector<8x1xf32>
    %31 = vector.broadcast %30 : vector<8x1xf32> to vector<8x8xf32>
    %32 = arith.mulf %27, %31 : vector<8x8xf32>
    %c0_13 = arith.constant 0 : index
    %c0_14 = arith.constant 0 : index
    %c0_15 = arith.constant 0 : index
    %c0_16 = arith.constant 0 : index
    %33 = vector.load %arg8[%c0_13, %c0_14, %c0_15, %c0_16] : memref<1x1x8x32xf32, #tpu.memory_space<vmem>>, vector<1x1x8x8xf32>
    %34 = vector.shape_cast %33 : vector<1x1x8x8xf32> to vector<8x8xf32>
    %35 = vector.shape_cast %32 : vector<8x8xf32> to vector<1x1x8x8xf32>
    tpu.vector_store %arg8[%c0_13, %c0_14, %c0_15, %c0_16], %35 {strides = array<i32>} : memref<1x1x8x32xf32, #tpu.memory_space<vmem>>, vector<1x1x8x8xf32>,
    %36 = arith.truncf %32 : vector<8x8xf32> to vector<8x8xbf16>
    %cst_17 = arith.constant dense<0.000000e+00> : vector<8x8xf32>
    %37 = tpu.matmul %36, %19, %cst_17 {dimension_numbers = #tpu.dot_dimension_numbers<[1], [0], [0], [1], [0, 0, 1, 1], [], []>} : vector<8x8xbf16>, vector<8x8xbf16>, vector<8x8xf32> -> vector<8x8xf32>
    %38 = arith.truncf %37 : vector<8x8xf32> to vector<8x8xbf16>
    %39 = vector.extract_strided_slice %12 {offsets = [0, 0], sizes = [8, 32], strides = [1, 1]} : vector<32x32xbf16> to vector<8x32xbf16>
    %cst_18 = arith.constant dense<0.000000e+00> : vector<8x32xf32>
    %40 = tpu.matmul %38, %39, %cst_18 {dimension_numbers = #tpu.dot_dimension_numbers<[1], [0], [0], [1], [0, 0, 1, 1], [], []>} : vector<8x8xbf16>, vector<8x32xbf16>, vector<8x32xf32> -> vector<8x32xf32>
    %41 = arith.addf %13, %40 : vector<8x32xf32>
    %42 = vector.extract_strided_slice %8 {offsets = [0, 8], sizes = [8, 8], strides = [1, 1]} : vector<8x32xf32> to vector<8x8xf32>
    %43 = arith.truncf %42 : vector<8x8xf32> to vector<8x8xbf16>
    %44 = vector.extract_strided_slice %9 {offsets = [0, 8], sizes = [8, 8], strides = [1, 1]} : vector<8x32xf32> to vector<8x8xf32>
    %45 = arith.truncf %44 : vector<8x8xf32> to vector<8x8xbf16>
    %46 = vector.extract_strided_slice %10 {offsets = [0, 8], sizes = [8, 8], strides = [1, 1]} : vector<8x32xf32> to vector<8x8xf32>
    %47 = arith.truncf %46 : vector<8x8xf32> to vector<8x8xbf16>
    %cst_19 = arith.constant dense<0.000000e+00> : vector<8x8xf32>
    %48 = tpu.matmul %43, %45, %cst_19 {dimension_numbers = #tpu.dot_dimension_numbers<[1], [1], [0], [0], [0, 0, 1, 0], [], []>} : vector<8x8xbf16>, vector<8x8xbf16>, vector<8x8xf32> -> vector<8x8xf32>
    %cst_20 = arith.constant 0.353553385 : f32
    %49 = vector.broadcast %cst_20 : f32 to vector<8x8xf32>
    %50 = arith.mulf %48, %49 : vector<8x8xf32>
    %cst_21 = arith.constant dense<0xFF800000> : vector<8xf32>
    %51 = vector.multi_reduction <maximumf>, %50, %cst_21 [1] : vector<8x8xf32> to vector<8xf32>
    %52 = vector.shape_cast %51 : vector<8xf32> to vector<8x1xf32>
    %53 = vector.broadcast %52 : vector<8x1xf32> to vector<8x8xf32>
    %54 = arith.subf %50, %53 : vector<8x8xf32>
    %55 = math.exp %54 : vector<8x8xf32>
    %cst_22 = arith.constant dense<0.000000e+00> : vector<8xf32>
    %56 = vector.multi_reduction <add>, %55, %cst_22 [1] : vector<8x8xf32> to vector<8xf32>
    %57 = vector.shape_cast %56 : vector<8xf32> to vector<8x1xf32>
    %58 = tpu.reciprocal %57 {approx = true} : vector<8x1xf32> -> vector<8x1xf32>
    %59 = vector.broadcast %58 : vector<8x1xf32> to vector<8x8xf32>
    %60 = arith.mulf %55, %59 : vector<8x8xf32>
    %c0_23 = arith.constant 0 : index
    %c0_24 = arith.constant 0 : index
    %c0_25 = arith.constant 0 : index
    %c8 = arith.constant 8 : index
    %61 = vector.load %arg8[%c0_23, %c0_24, %c0_25, %c8] : memref<1x1x8x32xf32, #tpu.memory_space<vmem>>, vector<1x1x8x8xf32>
    %62 = vector.shape_cast %61 : vector<1x1x8x8xf32> to vector<8x8xf32>
    %63 = vector.shape_cast %60 : vector<8x8xf32> to vector<1x1x8x8xf32>
    tpu.vector_store %arg8[%c0_23, %c0_24, %c0_25, %c8], %63 {strides = array<i32>} : memref<1x1x8x32xf32, #tpu.memory_space<vmem>>, vector<1x1x8x8xf32>,
    %64 = arith.truncf %60 : vector<8x8xf32> to vector<8x8xbf16>
    %cst_26 = arith.constant dense<0.000000e+00> : vector<8x8xf32>
    %65 = tpu.matmul %64, %47, %cst_26 {dimension_numbers = #tpu.dot_dimension_numbers<[1], [0], [0], [1], [0, 0, 1, 1], [], []>} : vector<8x8xbf16>, vector<8x8xbf16>, vector<8x8xf32> -> vector<8x8xf32>
    %66 = arith.truncf %65 : vector<8x8xf32> to vector<8x8xbf16>
    %67 = vector.extract_strided_slice %12 {offsets = [8, 0], sizes = [8, 32], strides = [1, 1]} : vector<32x32xbf16> to vector<8x32xbf16>
    %cst_27 = arith.constant dense<0.000000e+00> : vector<8x32xf32>
    %68 = tpu.matmul %66, %67, %cst_27 {dimension_numbers = #tpu.dot_dimension_numbers<[1], [0], [0], [1], [0, 0, 1, 1], [], []>} : vector<8x8xbf16>, vector<8x32xbf16>, vector<8x32xf32> -> vector<8x32xf32>
    %69 = arith.addf %41, %68 : vector<8x32xf32>
    %70 = vector.extract_strided_slice %8 {offsets = [0, 16], sizes = [8, 8], strides = [1, 1]} : vector<8x32xf32> to vector<8x8xf32>
    %71 = arith.truncf %70 : vector<8x8xf32> to vector<8x8xbf16>
    %72 = vector.extract_strided_slice %9 {offsets = [0, 16], sizes = [8, 8], strides = [1, 1]} : vector<8x32xf32> to vector<8x8xf32>
    %73 = arith.truncf %72 : vector<8x8xf32> to vector<8x8xbf16>
    %74 = vector.extract_strided_slice %10 {offsets = [0, 16], sizes = [8, 8], strides = [1, 1]} : vector<8x32xf32> to vector<8x8xf32>
    %75 = arith.truncf %74 : vector<8x8xf32> to vector<8x8xbf16>
    %cst_28 = arith.constant dense<0.000000e+00> : vector<8x8xf32>
    %76 = tpu.matmul %71, %73, %cst_28 {dimension_numbers = #tpu.dot_dimension_numbers<[1], [1], [0], [0], [0, 0, 1, 0], [], []>} : vector<8x8xbf16>, vector<8x8xbf16>, vector<8x8xf32> -> vector<8x8xf32>
    %cst_29 = arith.constant 0.353553385 : f32
    %77 = vector.broadcast %cst_29 : f32 to vector<8x8xf32>
    %78 = arith.mulf %76, %77 : vector<8x8xf32>
    %cst_30 = arith.constant dense<0xFF800000> : vector<8xf32>
    %79 = vector.multi_reduction <maximumf>, %78, %cst_30 [1] : vector<8x8xf32> to vector<8xf32>
    %80 = vector.shape_cast %79 : vector<8xf32> to vector<8x1xf32>
    %81 = vector.broadcast %80 : vector<8x1xf32> to vector<8x8xf32>
    %82 = arith.subf %78, %81 : vector<8x8xf32>
    %83 = math.exp %82 : vector<8x8xf32>
    %cst_31 = arith.constant dense<0.000000e+00> : vector<8xf32>
    %84 = vector.multi_reduction <add>, %83, %cst_31 [1] : vector<8x8xf32> to vector<8xf32>
    %85 = vector.shape_cast %84 : vector<8xf32> to vector<8x1xf32>
    %86 = tpu.reciprocal %85 {approx = true} : vector<8x1xf32> -> vector<8x1xf32>
    %87 = vector.broadcast %86 : vector<8x1xf32> to vector<8x8xf32>
    %88 = arith.mulf %83, %87 : vector<8x8xf32>
    %c0_32 = arith.constant 0 : index
    %c0_33 = arith.constant 0 : index
    %c0_34 = arith.constant 0 : index
    %c16 = arith.constant 16 : index
    %89 = vector.load %arg8[%c0_32, %c0_33, %c0_34, %c16] : memref<1x1x8x32xf32, #tpu.memory_space<vmem>>, vector<1x1x8x8xf32>
    %90 = vector.shape_cast %89 : vector<1x1x8x8xf32> to vector<8x8xf32>
    %91 = vector.shape_cast %88 : vector<8x8xf32> to vector<1x1x8x8xf32>
    tpu.vector_store %arg8[%c0_32, %c0_33, %c0_34, %c16], %91 {strides = array<i32>} : memref<1x1x8x32xf32, #tpu.memory_space<vmem>>, vector<1x1x8x8xf32>,
    %92 = arith.truncf %88 : vector<8x8xf32> to vector<8x8xbf16>
    %cst_35 = arith.constant dense<0.000000e+00> : vector<8x8xf32>
    %93 = tpu.matmul %92, %75, %cst_35 {dimension_numbers = #tpu.dot_dimension_numbers<[1], [0], [0], [1], [0, 0, 1, 1], [], []>} : vector<8x8xbf16>, vector<8x8xbf16>, vector<8x8xf32> -> vector<8x8xf32>
    %94 = arith.truncf %93 : vector<8x8xf32> to vector<8x8xbf16>
    %95 = vector.extract_strided_slice %12 {offsets = [16, 0], sizes = [8, 32], strides = [1, 1]} : vector<32x32xbf16> to vector<8x32xbf16>
    %cst_36 = arith.constant dense<0.000000e+00> : vector<8x32xf32>
    %96 = tpu.matmul %94, %95, %cst_36 {dimension_numbers = #tpu.dot_dimension_numbers<[1], [0], [0], [1], [0, 0, 1, 1], [], []>} : vector<8x8xbf16>, vector<8x32xbf16>, vector<8x32xf32> -> vector<8x32xf32>
    %97 = arith.addf %69, %96 : vector<8x32xf32>
    %98 = vector.extract_strided_slice %8 {offsets = [0, 24], sizes = [8, 8], strides = [1, 1]} : vector<8x32xf32> to vector<8x8xf32>
    %99 = arith.truncf %98 : vector<8x8xf32> to vector<8x8xbf16>
    %100 = vector.extract_strided_slice %9 {offsets = [0, 24], sizes = [8, 8], strides = [1, 1]} : vector<8x32xf32> to vector<8x8xf32>
    %101 = arith.truncf %100 : vector<8x8xf32> to vector<8x8xbf16>
    %102 = vector.extract_strided_slice %10 {offsets = [0, 24], sizes = [8, 8], strides = [1, 1]} : vector<8x32xf32> to vector<8x8xf32>
    %103 = arith.truncf %102 : vector<8x8xf32> to vector<8x8xbf16>
    %cst_37 = arith.constant dense<0.000000e+00> : vector<8x8xf32>
    %104 = tpu.matmul %99, %101, %cst_37 {dimension_numbers = #tpu.dot_dimension_numbers<[1], [1], [0], [0], [0, 0, 1, 0], [], []>} : vector<8x8xbf16>, vector<8x8xbf16>, vector<8x8xf32> -> vector<8x8xf32>
    %cst_38 = arith.constant 0.353553385 : f32
    %105 = vector.broadcast %cst_38 : f32 to vector<8x8xf32>
    %106 = arith.mulf %104, %105 : vector<8x8xf32>
    %cst_39 = arith.constant dense<0xFF800000> : vector<8xf32>
    %107 = vector.multi_reduction <maximumf>, %106, %cst_39 [1] : vector<8x8xf32> to vector<8xf32>
    %108 = vector.shape_cast %107 : vector<8xf32> to vector<8x1xf32>
    %109 = vector.broadcast %108 : vector<8x1xf32> to vector<8x8xf32>
    %110 = arith.subf %106, %109 : vector<8x8xf32>
    %111 = math.exp %110 : vector<8x8xf32>
    %cst_40 = arith.constant dense<0.000000e+00> : vector<8xf32>
    %112 = vector.multi_reduction <add>, %111, %cst_40 [1] : vector<8x8xf32> to vector<8xf32>
    %113 = vector.shape_cast %112 : vector<8xf32> to vector<8x1xf32>
    %114 = tpu.reciprocal %113 {approx = true} : vector<8x1xf32> -> vector<8x1xf32>
    %115 = vector.broadcast %114 : vector<8x1xf32> to vector<8x8xf32>
    %116 = arith.mulf %111, %115 : vector<8x8xf32>
    %c0_41 = arith.constant 0 : index
    %c0_42 = arith.constant 0 : index
    %c0_43 = arith.constant 0 : index
    %c24 = arith.constant 24 : index
    %117 = vector.load %arg8[%c0_41, %c0_42, %c0_43, %c24] : memref<1x1x8x32xf32, #tpu.memory_space<vmem>>, vector<1x1x8x8xf32>
    %118 = vector.shape_cast %117 : vector<1x1x8x8xf32> to vector<8x8xf32>
    %119 = vector.shape_cast %116 : vector<8x8xf32> to vector<1x1x8x8xf32>
    tpu.vector_store %arg8[%c0_41, %c0_42, %c0_43, %c24], %119 {strides = array<i32>} : memref<1x1x8x32xf32, #tpu.memory_space<vmem>>, vector<1x1x8x8xf32>,
    %120 = arith.truncf %116 : vector<8x8xf32> to vector<8x8xbf16>
    %cst_44 = arith.constant dense<0.000000e+00> : vector<8x8xf32>
    %121 = tpu.matmul %120, %103, %cst_44 {dimension_numbers = #tpu.dot_dimension_numbers<[1], [0], [0], [1], [0, 0, 1, 1], [], []>} : vector<8x8xbf16>, vector<8x8xbf16>, vector<8x8xf32> -> vector<8x8xf32>
    %122 = arith.truncf %121 : vector<8x8xf32> to vector<8x8xbf16>
    %123 = vector.extract_strided_slice %12 {offsets = [24, 0], sizes = [8, 32], strides = [1, 1]} : vector<32x32xbf16> to vector<8x32xbf16>
    %cst_45 = arith.constant dense<0.000000e+00> : vector<8x32xf32>
    %124 = tpu.matmul %122, %123, %cst_45 {dimension_numbers = #tpu.dot_dimension_numbers<[1], [0], [0], [1], [0, 0, 1, 1], [], []>} : vector<8x8xbf16>, vector<8x32xbf16>, vector<8x32xf32> -> vector<8x32xf32>
    %125 = arith.addf %97, %124 : vector<8x32xf32>
    %126 = arith.addf %125, %3 : vector<8x32xf32>
    %cst_46 = arith.constant dense<0.000000e+00> : vector<8xf32>
    %127 = vector.multi_reduction <add>, %126, %cst_46 [1] : vector<8x32xf32> to vector<8xf32>
    %128 = vector.shape_cast %127 : vector<8xf32> to vector<8x1xf32>
    %cst_47 = arith.constant 3.200000e+01 : f32
    %129 = vector.broadcast %cst_47 : f32 to vector<8x1xf32>
    %130 = arith.divf %128, %129 : vector<8x1xf32>
    %131 = vector.broadcast %130 : vector<8x1xf32> to vector<8x32xf32>
    %132 = arith.subf %126, %131 : vector<8x32xf32>
    %133 = arith.mulf %132, %132 : vector<8x32xf32>
    %cst_48 = arith.constant dense<0.000000e+00> : vector<8xf32>
    %134 = vector.multi_reduction <add>, %133, %cst_48 [1] : vector<8x32xf32> to vector<8xf32>
    %135 = vector.shape_cast %134 : vector<8xf32> to vector<8x1xf32>
    %cst_49 = arith.constant 3.200000e+01 : f32
    %136 = vector.broadcast %cst_49 : f32 to vector<8x1xf32>
    %137 = arith.divf %135, %136 : vector<8x1xf32>
    %138 = vector.broadcast %130 : vector<8x1xf32> to vector<8x32xf32>
    %139 = arith.subf %126, %138 : vector<8x32xf32>
    %cst_50 = arith.constant 9.99999974E-6 : f32
    %140 = vector.broadcast %cst_50 : f32 to vector<8x1xf32>
    %141 = arith.addf %137, %140 : vector<8x1xf32>
    %142 = math.rsqrt %141 : vector<8x1xf32>
    %143 = vector.broadcast %142 : vector<8x1xf32> to vector<8x32xf32>
    %144 = arith.mulf %139, %143 : vector<8x32xf32>
    %145 = arith.truncf %144 : vector<8x32xf32> to vector<8x32xbf16>
    %c0_51 = arith.constant 0 : index
    %c0_52 = arith.constant 0 : index
    %c0_53 = arith.constant 0 : index
    %146 = vector.load %arg5[%c0_51, %c0_52, %c0_53] : memref<1x32x64xbf16, #tpu.memory_space<vmem>>, vector<1x32x64xbf16>
    %147 = vector.shape_cast %146 : vector<1x32x64xbf16> to vector<32x64xbf16>
    %cst_54 = arith.constant dense<0.000000e+00> : vector<8x64xf32>
    %148 = tpu.matmul %145, %147, %cst_54 {dimension_numbers = #tpu.dot_dimension_numbers<[1], [0], [0], [1], [0, 0, 1, 1], [], []>} : vector<8x32xbf16>, vector<32x64xbf16>, vector<8x64xf32> -> vector<8x64xf32>
    %cst_55 = arith.constant 0.000000e+00 : f32
    %149 = vector.broadcast %cst_55 : f32 to vector<8x64xf32>
    %150 = arith.maximumf %148, %149 : vector<8x64xf32>
    %151 = arith.truncf %150 : vector<8x64xf32> to vector<8x64xbf16>
    %c0_56 = arith.constant 0 : index
    %c0_57 = arith.constant 0 : index
    %c0_58 = arith.constant 0 : index
    %152 = vector.load %arg6[%c0_56, %c0_57, %c0_58] : memref<1x64x32xbf16, #tpu.memory_space<vmem>>, vector<1x64x32xbf16>
    %153 = vector.shape_cast %152 : vector<1x64x32xbf16> to vector<64x32xbf16>
    %cst_59 = arith.constant dense<0.000000e+00> : vector<8x32xf32>
    %154 = tpu.matmul %151, %153, %cst_59 {dimension_numbers = #tpu.dot_dimension_numbers<[1], [0], [0], [1], [0, 0, 1, 1], [], []>} : vector<8x64xbf16>, vector<64x32xbf16>, vector<8x32xf32> -> vector<8x32xf32>
    %155 = arith.addf %154, %144 : vector<8x32xf32>
    %cst_60 = arith.constant dense<0.000000e+00> : vector<8xf32>
    %156 = vector.multi_reduction <add>, %155, %cst_60 [1] : vector<8x32xf32> to vector<8xf32>
    %157 = vector.shape_cast %156 : vector<8xf32> to vector<8x1xf32>
    %cst_61 = arith.constant 3.200000e+01 : f32
    %158 = vector.broadcast %cst_61 : f32 to vector<8x1xf32>
    %159 = arith.divf %157, %158 : vector<8x1xf32>
    %160 = vector.broadcast %159 : vector<8x1xf32> to vector<8x32xf32>
    %161 = arith.subf %155, %160 : vector<8x32xf32>
    %162 = arith.mulf %161, %161 : vector<8x32xf32>
    %cst_62 = arith.constant dense<0.000000e+00> : vector<8xf32>
    %163 = vector.multi_reduction <add>, %162, %cst_62 [1] : vector<8x32xf32> to vector<8xf32>
    %164 = vector.shape_cast %163 : vector<8xf32> to vector<8x1xf32>
    %cst_63 = arith.constant 3.200000e+01 : f32
    %165 = vector.broadcast %cst_63 : f32 to vector<8x1xf32>
    %166 = arith.divf %164, %165 : vector<8x1xf32>
    %167 = vector.broadcast %159 : vector<8x1xf32> to vector<8x32xf32>
    %168 = arith.subf %155, %167 : vector<8x32xf32>
    %cst_64 = arith.constant 9.99999974E-6 : f32
    %169 = vector.broadcast %cst_64 : f32 to vector<8x1xf32>
    %170 = arith.addf %166, %169 : vector<8x1xf32>
    %171 = math.rsqrt %170 : vector<8x1xf32>
    %172 = vector.broadcast %171 : vector<8x1xf32> to vector<8x32xf32>
    %173 = arith.mulf %168, %172 : vector<8x32xf32>
    %c0_65 = arith.constant 0 : index
    %c0_66 = arith.constant 0 : index
    %174 = vector.load %arg9[%c0_65, %c0_66] : memref<8x32xf32, #tpu.memory_space<vmem>>, vector<8x32xf32>
    tpu.vector_store %arg9[%c0_65, %c0_66], %173 {strides = array<i32>} : memref<8x32xf32, #tpu.memory_space<vmem>>, vector<8x32xf32>,
    %c1_i32 = arith.constant 1 : i32
    %175 = arith.cmpi eq, %arg1, %c1_i32 : i32
    %176 = arith.extui %175 : i1 to i32
    %c0_i32_67 = arith.constant 0 : i32
    %177 = arith.cmpi ne, %176, %c0_i32_67 : i32
    scf.if %177 {
      %c0_68 = arith.constant 0 : index
      %c0_69 = arith.constant 0 : index
      %c0_70 = arith.constant 0 : index
      %178 = vector.load %arg7[%c0_68, %c0_69, %c0_70] : memref<1x8x32xf32, #tpu.memory_space<vmem>>, vector<1x8x32xf32>
      %179 = vector.shape_cast %178 : vector<1x8x32xf32> to vector<8x32xf32>
      %180 = vector.shape_cast %173 : vector<8x32xf32> to vector<1x8x32xf32>
      tpu.vector_store %arg7[%c0_68, %c0_69, %c0_70], %180 {strides = array<i32>} : memref<1x8x32xf32, #tpu.memory_space<vmem>>, vector<1x8x32xf32>,
    } else {
    }
    return
  }
  func.func @transform_0(%arg0: i32, %arg1: i32) -> (i32, i32, i32) {
    %c0_i32 = arith.constant 0 : i32
    %c0_i32_0 = arith.constant 0 : i32
    %c0_i32_1 = arith.constant 0 : i32
    return %arg0, %c0_i32, %c0_i32_0 : i32, i32, i32
  }
  func.func @transform_1(%arg0: i32, %arg1: i32) -> (i32, i32, i32) {
    %c0_i32 = arith.constant 0 : i32
    %c0_i32_0 = arith.constant 0 : i32
    %c0_i32_1 = arith.constant 0 : i32
    return %arg1, %c0_i32, %c0_i32_0 : i32, i32, i32
  }
  func.func @transform_2(%arg0: i32, %arg1: i32) -> (i32, i32, i32) {
    %c0_i32 = arith.constant 0 : i32
    %c0_i32_0 = arith.constant 0 : i32
    %c0_i32_1 = arith.constant 0 : i32
    return %arg1, %c0_i32, %c0_i32_0 : i32, i32, i32
  }
  func.func @transform_3(%arg0: i32, %arg1: i32) -> (i32, i32, i32) {
    %c0_i32 = arith.constant 0 : i32
    %c0_i32_0 = arith.constant 0 : i32
    %c0_i32_1 = arith.constant 0 : i32
    return %arg1, %c0_i32, %c0_i32_0 : i32, i32, i32
  }
  func.func @transform_4(%arg0: i32, %arg1: i32) -> (i32, i32, i32) {
    %c0_i32 = arith.constant 0 : i32
    %c0_i32_0 = arith.constant 0 : i32
    %c0_i32_1 = arith.constant 0 : i32
    return %arg1, %c0_i32, %c0_i32_0 : i32, i32, i32
  }
  func.func @transform_5(%arg0: i32, %arg1: i32) -> (i32, i32, i32) {
    %c0_i32 = arith.constant 0 : i32
    %c0_i32_0 = arith.constant 0 : i32
    %c0_i32_1 = arith.constant 0 : i32
    return %arg0, %c0_i32, %c0_i32_0 : i32, i32, i32
  }
  func.func @transform_6(%arg0: i32, %arg1: i32) -> (i32, i32, i32, i32) {
    %c0_i32 = arith.constant 0 : i32
    %c0_i32_0 = arith.constant 0 : i32
    %c0_i32_1 = arith.constant 0 : i32
    return %arg0, %arg1, %c0_i32, %c0_i32_0 : i32, i32, i32, i32
  }
}

</mosaic_0001>

<llo_original>
// kernel: tpu_custom_call.1
$region0: #{tpu_custom_call.1}
  #allocation0 [shape = 'u32[]', space=smem, size = 0x4, offset = 0x4, fixed_abs, tag = 'smem constant byte address 0x4 - core index']
  #allocation1 [shape = 'u32[144,128]{1,0:T(1,128)}', space=vmem, size = 0x12000, scoped, tag = 'internal scratch']
  #allocation2 [shape = 'f32[8,32]{1,0:T(8,128)}', space=vmem, size = 0x1000, scoped, tag = 'scratch operand']
  %s0 = inlined_call_operand.hbm [shape: f32[2,8,32], index: 0, kind: input, shape index: {}]
  %s1 = inlined_call_operand.vmem [shape: bf16[2,32,96], index: 1, kind: input, shape index: {}]
  %s2 = inlined_call_operand.vmem [shape: bf16[2,32,32], index: 2, kind: input, shape index: {}]
  %s3 = inlined_call_operand.vmem [shape: bf16[2,32,64], index: 3, kind: input, shape index: {}]
  %s4 = inlined_call_operand.vmem [shape: bf16[2,64,32], index: 4, kind: input, shape index: {}]
  %s5 = inlined_call_operand.hbm [shape: f32[2,8,32], index: 5, kind: output, shape index: {0}]
  %s6 = inlined_call_operand.hbm [shape: f32[2,2,8,32], index: 6, kind: output, shape index: {1}]
  %7 = xla_tuple %s5, %s6
  %s8 = sld [smem:[#allocation0]]
  $region73: #{tpu_custom_call.1} parent=0
    _
  %s10 = ssub.s32 1, %s8
  %s11 = scalar_select 0, %s10, %s8
  $region1: #{tpu_custom_call.1} parent=0
    #allocation3 [shape = 'u8[8192]{0}', space=vmem, size = 0x2000, scoped, tag = 'input window, operand 0']
    #allocation4 [shape = 's32[2]{0}', space=sflag, size = 0x8, scoped, tag = 'scoped memory for tpu_custom_call.1']
    #allocation5 [shape = 's32[2]{0}', space=sflag, size = 0x8, scoped, tag = 'scoped memory for tpu_custom_call.1']
    #allocation6 [shape = 'u8[8192]{0}', space=vmem, size = 0x2000, scoped, tag = 'output window, operand 0']
    #allocation7 [shape = 'u8[8192]{0}', space=vmem, size = 0x2000, scoped, tag = 'output window, operand 1']
    #allocation8 [shape = 's32[2]{0}', space=sflag, size = 0x8, scoped, tag = 'scoped memory for tpu_custom_call.1']
    %12 = vsyncpa [#allocation4], 0
    %s13 = scalar_lea.sflag [#allocation4], 1
    %14 = vsyncpa %s13, 0
    %15 = vsyncpa [#allocation5], 0
    %s16 = scalar_lea.sflag [#allocation5], 1
    %17 = vsyncpa %s16, 0
    %18 = vsyncpa [#allocation8], 0
    %s19 = scalar_lea.sflag [#allocation8], 1
    %20 = vsyncpa %s19, 0
    loop: start=0, step=1, limit=6
    $region2: #{tpu_custom_call.1} parent=1 // loop_pre_header
      _
    $region3: #{tpu_custom_call.1} parent=1 // loop_header
      %s22 = sphi 0, %s26
      %p23 = scmp.ge.s32.totalorder %s22, 6
      %s29 = sphi 0, %s41
      %s30 = sphi 0, %s37
      %s31 = sphi 0, %s29
      %s32 = sphi 0, %s30
      %s33 = sphi 0, %s31
      %s34 = sphi 0, %s32
      %s44 = sphi 0, %s46
      %s47 = sphi 0, %s44
      %s48 = sphi 0, %s47
      %s64 = sphi 0, %s48
      %s70 = sphi 0, %s72
      %s73 = sphi 0, %s70
      %s74 = sphi 0, %s73
      %s90 = sphi 0, %s74
      %s96 = sphi 0, %s98
      %s99 = sphi 0, %s96
      %s100 = sphi 0, %s99
      %s116 = sphi 0, %s100
      %s122 = sphi 0, %s124
      %s125 = sphi 0, %s122
      %s126 = sphi 0, %s125
      %s142 = sphi 0, %s126
      %s148 = sphi 0, %s150
      %s151 = sphi 0, %s148
      %s152 = sphi 0, %s151
      %s168 = sphi 0, %s152
      %s174 = sphi 0, %s176
      %s177 = sphi 0, %s174
      %s178 = sphi 0, %s177
      %s194 = sphi 0, %s178
      %s202 = sphi 0, %s204
      %s205 = sphi 0, %s202
      %s206 = sphi 0, %s205
      %s222 = sphi 0, %s206
    $region4: #{tpu_custom_call.1} parent=1 // loop_header_branch
      %25 = sbr.rel (%p23) target = $region8
    $region5: #{tpu_custom_call.1} parent=1 // loop_body
      %s27 = ssub.s32 %s22, 1
      %s28 = ssub.s32 %s22, 2
      %s35 = sadd.s32 1, %s30
      %p36 = scmp.ge.s32.totalorder %s35, 2
      %s37 = scalar_select %p36, 0, %s35
      %s38 = sadd.s32 1, %s29
      %s39 = scalar_select %p36, %s38, %s29
      %p40 = scmp.ge.s32.totalorder %s39, 2
      %s41 = scalar_select %p40, 0, %s39
      %s42 = ssub.s32 %s29, %s41
      %p43 = scmp.eq.s32.totalorder %s42, 0
      %s45 = sadd.s32 %s44, 1
      %s46 = scalar_select %p43, %s44, %s45
      %p49 = pneg %p43
      %p50 = scmp.eq.s32.totalorder %s22, 3
      %p51 = por %p49, %p50
      %p52 = scmp.ne.s32.totalorder %s44, %s47
      %p53 = scmp.eq.s32.totalorder %s22, 0
      %p54 = por %p52, %p53
      %p55 = scmp.ne.s32.totalorder %s44, %s47
      %p56 = scmp.eq.s32.totalorder %s27, 3
      %p57 = por %p55, %p56
      %p58 = scmp.ne.s32.totalorder %s47, %s48
      %p59 = scmp.eq.s32.totalorder %s27, 0
      %p60 = por %p58, %p59
      %p61 = scmp.ne.s32.totalorder %s47, %s48
      %p62 = scmp.eq.s32.totalorder %s28, 3
      %p63 = por %p61, %p62
      %p65 = scmp.ne.s32.totalorder %s48, %s64
      %p66 = scmp.eq.s32.totalorder %s28, 0
      %p67 = por %p65, %p66
      %s68 = ssub.s32 %s30, %s37
      %p69 = scmp.eq.s32.totalorder %s68, 0
      %s71 = sadd.s32 %s70, 1
      %s72 = scalar_select %p69, %s70, %s71
      %p75 = pneg %p69
      %p76 = scmp.eq.s32.totalorder %s22, 3
      %p77 = por %p75, %p76
      %p78 = scmp.ne.s32.totalorder %s70, %s73
      %p79 = scmp.eq.s32.totalorder %s22, 0
      %p80 = por %p78, %p79
      %p81 = scmp.ne.s32.totalorder %s70, %s73
      %p82 = scmp.eq.s32.totalorder %s27, 3
      %p83 = por %p81, %p82
      %p84 = scmp.ne.s32.totalorder %s73, %s74
      %p85 = scmp.eq.s32.totalorder %s27, 0
      %p86 = por %p84, %p85
      %p87 = scmp.ne.s32.totalorder %s73, %s74
      %p88 = scmp.eq.s32.totalorder %s28, 3
      %p89 = por %p87, %p88
      %p91 = scmp.ne.s32.totalorder %s74, %s90
      %p92 = scmp.eq.s32.totalorder %s28, 0
      %p93 = por %p91, %p92
      %s94 = ssub.s32 %s30, %s37
      %p95 = scmp.eq.s32.totalorder %s94, 0
      %s97 = sadd.s32 %s96, 1
      %s98 = scalar_select %p95, %s96, %s97
      %p101 = pneg %p95
      %p102 = scmp.eq.s32.totalorder %s22, 3
      %p103 = por %p101, %p102
      %p104 = scmp.ne.s32.totalorder %s96, %s99
      %p105 = scmp.eq.s32.totalorder %s22, 0
      %p106 = por %p104, %p105
      %p107 = scmp.ne.s32.totalorder %s96, %s99
      %p108 = scmp.eq.s32.totalorder %s27, 3
      %p109 = por %p107, %p108
      %p110 = scmp.ne.s32.totalorder %s99, %s100
      %p111 = scmp.eq.s32.totalorder %s27, 0
      %p112 = por %p110, %p111
      %p113 = scmp.ne.s32.totalorder %s99, %s100
      %p114 = scmp.eq.s32.totalorder %s28, 3
      %p115 = por %p113, %p114
      %p117 = scmp.ne.s32.totalorder %s100, %s116
      %p118 = scmp.eq.s32.totalorder %s28, 0
      %p119 = por %p117, %p118
      %s120 = ssub.s32 %s30, %s37
      %p121 = scmp.eq.s32.totalorder %s120, 0
      %s123 = sadd.s32 %s122, 1
      %s124 = scalar_select %p121, %s122, %s123
      %p127 = pneg %p121
      %p128 = scmp.eq.s32.totalorder %s22, 3
      %p129 = por %p127, %p128
      %p130 = scmp.ne.s32.totalorder %s122, %s125
      %p131 = scmp.eq.s32.totalorder %s22, 0
      %p132 = por %p130, %p131
      %p133 = scmp.ne.s32.totalorder %s122, %s125
      %p134 = scmp.eq.s32.totalorder %s27, 3
      %p135 = por %p133, %p134
      %p136 = scmp.ne.s32.totalorder %s125, %s126
      %p137 = scmp.eq.s32.totalorder %s27, 0
      %p138 = por %p136, %p137
      %p139 = scmp.ne.s32.totalorder %s125, %s126
      %p140 = scmp.eq.s32.totalorder %s28, 3
      %p141 = por %p139, %p140
      %p143 = scmp.ne.s32.totalorder %s126, %s142
      %p144 = scmp.eq.s32.totalorder %s28, 0
      %p145 = por %p143, %p144
      %s146 = ssub.s32 %s30, %s37
      %p147 = scmp.eq.s32.totalorder %s146, 0
      %s149 = sadd.s32 %s148, 1
      %s150 = scalar_select %p147, %s148, %s149
      %p153 = pneg %p147
      %p154 = scmp.eq.s32.totalorder %s22, 3
      %p155 = por %p153, %p154
      %p156 = scmp.ne.s32.totalorder %s148, %s151
      %p157 = scmp.eq.s32.totalorder %s22, 0
      %p158 = por %p156, %p157
      %p159 = scmp.ne.s32.totalorder %s148, %s151
      %p160 = scmp.eq.s32.totalorder %s27, 3
      %p161 = por %p159, %p160
      %p162 = scmp.ne.s32.totalorder %s151, %s152
      %p163 = scmp.eq.s32.totalorder %s27, 0
      %p164 = por %p162, %p163
      %p165 = scmp.ne.s32.totalorder %s151, %s152
      %p166 = scmp.eq.s32.totalorder %s28, 3
      %p167 = por %p165, %p166
      %p169 = scmp.ne.s32.totalorder %s152, %s168
      %p170 = scmp.eq.s32.totalorder %s28, 0
      %p171 = por %p169, %p170
      %s172 = ssub.s32 %s29, %s41
      %p173 = scmp.eq.s32.totalorder %s172, 0
      %s175 = sadd.s32 %s174, 1
      %s176 = scalar_select %p173, %s174, %s175
      %p179 = pneg %p173
      %p180 = scmp.eq.s32.totalorder %s22, 3
      %p181 = por %p179, %p180
      %p182 = scmp.ne.s32.totalorder %s174, %s177
      %p183 = scmp.eq.s32.totalorder %s22, 0
      %p184 = por %p182, %p183
      %p185 = scmp.ne.s32.totalorder %s174, %s177
      %p186 = scmp.eq.s32.totalorder %s27, 3
      %p187 = por %p185, %p186
      %p188 = scmp.ne.s32.totalorder %s177, %s178
      %p189 = scmp.eq.s32.totalorder %s27, 0
      %p190 = por %p188, %p189
      %p191 = scmp.ne.s32.totalorder %s177, %s178
      %p192 = scmp.eq.s32.totalorder %s28, 3
      %p193 = por %p191, %p192
      %p195 = scmp.ne.s32.totalorder %s178, %s194
      %p196 = scmp.eq.s32.totalorder %s28, 0
      %p197 = por %p195, %p196
      %s198 = ssub.s32 %s29, %s41
      %s199 = ssub.s32 %s30, %s37
      %s200 = sor.u32 %s198, %s199
      %p201 = scmp.eq.s32.totalorder %s200, 0
      %s203 = sadd.s32 %s202, 1
      %s204 = scalar_select %p201, %s202, %s203
      %p207 = pneg %p201
      %p208 = scmp.eq.s32.totalorder %s22, 3
      %p209 = por %p207, %p208
      %p210 = scmp.ne.s32.totalorder %s202, %s205
      %p211 = scmp.eq.s32.totalorder %s22, 0
      %p212 = por %p210, %p211
      %p213 = scmp.ne.s32.totalorder %s202, %s205
      %p214 = scmp.eq.s32.totalorder %s27, 3
      %p215 = por %p213, %p214
      %p216 = scmp.ne.s32.totalorder %s205, %s206
      %p217 = scmp.eq.s32.totalorder %s27, 0
      %p218 = por %p216, %p217
      %p219 = scmp.ne.s32.totalorder %s205, %s206
      %p220 = scmp.eq.s32.totalorder %s28, 3
      %p221 = por %p219, %p220
      %p223 = scmp.ne.s32.totalorder %s206, %s222
      %p224 = scmp.eq.s32.totalorder %s28, 0
      %p225 = por %p223, %p224
      %p226 = scmp.le.s32.totalorder 1, %s22
      %p227 = scmp.lt.s32.totalorder %s22, 5
      %p228 = pnand %p226, %p227
      %p229 = pneg %p228
      // Predicated region
      $region9: #{tpu_custom_call.1} parent=5 // pred_check
        _
      $region10: #{tpu_custom_call.1} parent=5 // pred_check_branch
        %231 = sbr.rel (%p228) target = $region12
      $region11: #{tpu_custom_call.1} parent=5 // pred_region
        %s232 = ssub.s32 %s22, 1
      $region12: #{tpu_custom_call.1} parent=5 // pred_fallthru
        _
      %p233 = scmp.lt.s32.totalorder %s22, 4
      // Predicated region
      $region13: #{tpu_custom_call.1} parent=5 // pred_check
        %p234 = pneg %p233
      $region14: #{tpu_custom_call.1} parent=5 // pred_check_branch
        %236 = sbr.rel (%p234) target = $region16
      $region15: #{tpu_custom_call.1} parent=5 // pred_region
        // Predicated region
        $region17: #{tpu_custom_call.1} parent=15 // pred_check
          %p237 = pneg %p54
        $region18: #{tpu_custom_call.1} parent=15 // pred_check_branch
          %239 = sbr.rel (%p237) target = $region20
        $region19: #{tpu_custom_call.1} parent=15 // pred_region
          %s240 = sand.u32 %s44, 1
          %s241 = scalar_lea.sflag [#allocation4], %s240
          %s242 = sand.u32 %s44, 1
          %s243 = smul.addr %s242, 8
          %s244 = scalar_lea.vmem [#allocation3], %s243
          %s246 = ssub.s32 128, 128
          %247 = vsyncadd %s241, %s246
          %s248 = smul.addr %s29, 128
          %s249 = scalar_lea.hbm %s0, %s248
          %s251 = sshll.u32 %s244, 4
          %s252 = int_to_ptr.vmem [resolvable:$true] %s251
          %254 = dma.hbm_to_vmem [thread:$0]  %s249, 128, %s252, %s241
        $region20: #{tpu_custom_call.1} parent=15 // pred_fallthru
          _
        // Predicated region
        $region21: #{tpu_custom_call.1} parent=15 // pred_check
          %p255 = pneg %p80
        $region22: #{tpu_custom_call.1} parent=15 // pred_check_branch
          %257 = sbr.rel (%p255) target = $region24
        $region23: #{tpu_custom_call.1} parent=15 // pred_region
          %p258 = scmp.lt.s32.totalorder %s30, 1
          %s259 = scalar_select %p258, %s30, 1
          %s260 = smul.addr %s259, 4
          %s261 = smul.addr %s260, 4
          %s262 = scalar_lea.vmem %s1, %s261
        $region24: #{tpu_custom_call.1} parent=15 // pred_fallthru
          _
        // Predicated region
        $region25: #{tpu_custom_call.1} parent=15 // pred_check
          %p263 = pneg %p106
        $region26: #{tpu_custom_call.1} parent=15 // pred_check_branch
          %265 = sbr.rel (%p263) target = $region28
        $region27: #{tpu_custom_call.1} parent=15 // pred_region
          %p266 = scmp.lt.s32.totalorder %s30, 1
          %s267 = scalar_select %p266, %s30, 1
          %s268 = smul.addr %s267, 4
          %s269 = smul.addr %s268, 4
          %s270 = scalar_lea.vmem %s2, %s269
        $region28: #{tpu_custom_call.1} parent=15 // pred_fallthru
          _
        // Predicated region
        $region29: #{tpu_custom_call.1} parent=15 // pred_check
          %p271 = pneg %p132
        $region30: #{tpu_custom_call.1} parent=15 // pred_check_branch
          %273 = sbr.rel (%p271) target = $region32
        $region31: #{tpu_custom_call.1} parent=15 // pred_region
          %p274 = scmp.lt.s32.totalorder %s30, 1
          %s275 = scalar_select %p274, %s30, 1
          %s276 = smul.addr %s275, 4
          %s277 = smul.addr %s276, 4
          %s278 = scalar_lea.vmem %s3, %s277
        $region32: #{tpu_custom_call.1} parent=15 // pred_fallthru
          _
        // Predicated region
        $region33: #{tpu_custom_call.1} parent=15 // pred_check
          %p279 = pneg %p158
        $region34: #{tpu_custom_call.1} parent=15 // pred_check_branch
          %281 = sbr.rel (%p279) target = $region36
        $region35: #{tpu_custom_call.1} parent=15 // pred_region
          %p282 = scmp.lt.s32.totalorder %s30, 1
          %s283 = scalar_select %p282, %s30, 1
          %s284 = smul.addr %s283, 8
          %s285 = smul.addr %s284, 4
          %s286 = scalar_lea.vmem %s4, %s285
        $region36: #{tpu_custom_call.1} parent=15 // pred_fallthru
          _
      $region16: #{tpu_custom_call.1} parent=5 // pred_fallthru
        _
      %p287 = scmp.le.s32.totalorder 1, %s22
      %p288 = scmp.lt.s32.totalorder %s22, 5
      %p289 = pnand %p287, %p288
      %p290 = pneg %p289
      // Predicated region
      $region37: #{tpu_custom_call.1} parent=5 // pred_check
        _
      $region38: #{tpu_custom_call.1} parent=5 // pred_check_branch
        %292 = sbr.rel (%p289) target = $region40
      $region39: #{tpu_custom_call.1} parent=5 // pred_region
        %s293 = ssub.s32 %s22, 1
        %s294 = sand.u32 %s47, 1
        %s295 = scalar_lea.sflag [#allocation4], %s294
        %s296 = sand.u32 %s47, 1
        %s297 = smul.addr %s296, 8
        %s298 = scalar_lea.vmem [#allocation3], %s297
        // Predicated region
        $region41: #{tpu_custom_call.1} parent=39 // pred_check
          %p299 = pneg %p60
        $region42: #{tpu_custom_call.1} parent=39 // pred_check_branch
          %301 = sbr.rel (%p299) target = $region44
        $region43: #{tpu_custom_call.1} parent=39 // pred_region
          %302 = dma.done %s295, 128
        $region44: #{tpu_custom_call.1} parent=39 // pred_fallthru
          _
        %s303 = sand.u32 %s47, 1
        %s304 = scalar_lea.sflag [#allocation4], %s303
        %s305 = sand.u32 %s47, 1
        %s306 = smul.addr %s305, 8
        %s307 = scalar_lea.vmem [#allocation3], %s306
        %p308 = pneg %p60
        %p309 = pneg %p57
        %p310 = scmp.lt.s32.totalorder %s32, 1
        %s311 = scalar_select %p310, %s32, 1
        %s312 = smul.addr %s311, 4
        %s313 = smul.addr %s312, 4
        %s314 = scalar_lea.vmem %s1, %s313
        %p315 = pneg %p86
        %p316 = pneg %p83
        %p317 = scmp.lt.s32.totalorder %s32, 1
        %s318 = scalar_select %p317, %s32, 1
        %s319 = smul.addr %s318, 4
        %s320 = smul.addr %s319, 4
        %s321 = scalar_lea.vmem %s2, %s320
        %p322 = pneg %p112
        %p323 = pneg %p109
        %p324 = scmp.lt.s32.totalorder %s32, 1
        %s325 = scalar_select %p324, %s32, 1
        %s326 = smul.addr %s325, 4
        %s327 = smul.addr %s326, 4
        %s328 = scalar_lea.vmem %s3, %s327
        %p329 = pneg %p138
        %p330 = pneg %p135
        %p331 = scmp.lt.s32.totalorder %s32, 1
        %s332 = scalar_select %p331, %s32, 1
        %s333 = smul.addr %s332, 8
        %s334 = smul.addr %s333, 4
        %s335 = scalar_lea.vmem %s4, %s334
        %p336 = pneg %p164
        %p337 = pneg %p161
        %p338 = pneg %p190
        %p339 = pneg %p187
        %s340 = sand.u32 %s177, 1
        %s341 = scalar_lea.sflag [#allocation5], %s340
        %s342 = sand.u32 %s177, 1
        %s343 = smul.addr %s342, 8
        %s344 = scalar_lea.vmem [#allocation6], %s343
        %p345 = pneg %p218
        %p346 = pneg %p215
        %s347 = sand.u32 %s205, 1
        %s348 = scalar_lea.sflag [#allocation8], %s347
        %s349 = sand.u32 %s205, 1
        %s350 = smul.addr %s349, 8
        %s351 = scalar_lea.vmem [#allocation7], %s350
        %p352 = scmp.lt.s32.totalorder %s32, 1
        %s353 = scalar_select %p352, %s32, 1
        %s354 = smul.addr %s353, 4
        %s355 = smul.addr %s354, 4
        %s356 = scalar_lea.vmem %s1, %s355
        %p357 = scmp.lt.s32.totalorder %s32, 1
        %s358 = scalar_select %p357, %s32, 1
        %s359 = smul.addr %s358, 4
        %s360 = smul.addr %s359, 4
        %s361 = scalar_lea.vmem %s2, %s360
        %p362 = scmp.lt.s32.totalorder %s32, 1
        %s363 = scalar_select %p362, %s32, 1
        %s364 = smul.addr %s363, 4
        %s365 = smul.addr %s364, 4
        %s366 = scalar_lea.vmem %s3, %s365
        %p367 = scmp.lt.s32.totalorder %s32, 1
        %s368 = scalar_select %p367, %s32, 1
        %s369 = smul.addr %s368, 8
        %s370 = smul.addr %s369, 4
        %s371 = scalar_lea.vmem %s4, %s370
        %p373 = scmp.eq.s32.totalorder %s32, 0
        // Predicated region
        $region45: #{tpu_custom_call.1} parent=39 // pred_check
          %p374 = pneg %p373
        $region46: #{tpu_custom_call.1} parent=39 // pred_check_branch
          %376 = sbr.rel (%p374) target = $region48
        $region47: #{tpu_custom_call.1} parent=39 // pred_region
          %v377 = vld [vmem:[%s298] sm:$0xff]
          %vm378 = vcmask 261120
          %379 = vst.msk [vmem:[#allocation2] sm:$0xff] %vm378, %v377
        $region48: #{tpu_custom_call.1} parent=39 // pred_fallthru
          _
        %v380 = vld [vmem:[#allocation2] sm:$0xff]
        %v381 = vpack.c.bf16 %v380, %v380
        %v382 = vld [vmem:[%s356] sm:$0xf]
        %v383 = vld [vmem:[%s356 + $0x4] sm:$0xf]
        %v384 = vld [vmem:[%s356 + $0x8] sm:$0xf]
        %v385 = vld [vmem:[%s356 + $0xc] sm:$0xf]
        %v390 = vunpack.c.l.b16 %v382
        %v391 = vunpack.c.l.b16 %v383
        %v392 = vunpack.c.l.b16 %v384
        %v393 = vunpack.c.l.b16 %v385
        %v394 = vpack.c.b16 %v391, %v390
        %v395 = vpack.c.b16 %v393, %v392
        %vm398 = vcmask 261120
        %v400 = vsel %vm398, %v381, 0
        %402 = vmatprep.subr.bf16.mxu0 0
        %403 = vmatpush1.bf16.msra.mxu0 %v394
        %404 = vmatprep.subr.bf16.mxu0 0
        %405 = vmatpush1.bf16.msra.mxu0 %v395
        %406 = vmatprep.subr.bf16.mxu0 0
        %407 = vmatpush1.bf16.msra.mxu0 0
        %408 = vmatprep.subr.bf16.mxu0 0
        %409 = vmatpush1.bf16.msra.mxu0 0
        %410 = vmatprep.subr.bf16.mxu0 0
        %411 = vmatpush1.bf16.msra.mxu0 0
        %412 = vmatprep.subr.bf16.mxu0 0
        %413 = vmatpush1.bf16.msra.mxu0 0
        %414 = vmatprep.subr.bf16.mxu0 0
        %415 = vmatpush1.bf16.msra.mxu0 0
        %416 = vmatprep.subr.bf16.mxu0 0
        %417 = vmatpush1.bf16.msra.mxu0 0
        %418 = vmatprep.subr.bf16.mxu0 0
        %419 = vmatpush1.bf16.msra.mxu0 0
        %420 = vmatprep.subr.bf16.mxu0 0
        %421 = vmatpush1.bf16.msra.mxu0 0
        %422 = vmatprep.subr.bf16.mxu0 0
        %423 = vmatpush1.bf16.msra.mxu0 0
        %424 = vmatprep.subr.bf16.mxu0 0
        %425 = vmatpush1.bf16.msra.mxu0 0
        %426 = vmatprep.subr.bf16.mxu0 0
        %427 = vmatpush1.bf16.msra.mxu0 0
        %428 = vmatprep.subr.bf16.mxu0 0
        %429 = vmatpush1.bf16.msra.mxu0 0
        %430 = vmatprep.subr.bf16.mxu0 0
        %431 = vmatpush1.bf16.msra.mxu0 0
        %432 = vmatprep.subr.bf16.mxu0 0
        %433 = vmatpush1.bf16.msra.mxu0 0
        %434 = vmatprep.mubr.bf16.mxu0 0
        %435 = vmatmul.mubr.bf16.gmra.mrb[0].mxu0 %v400
        %v436 = vpop.f32.mrb[0].mxu0
        %v437 = vadd.f32 0.0, %v436
        %v438 = vpop.f32.mrb[0].mxu0
        %v439 = vpop.f32.mrb[0].mxu0
        %v440 = vpop.f32.mrb[0].mxu0
        %441 = vdwg.mxu0
        %v442 = vld [vmem:[%s361] sm:$0xf]
        %v443 = vld [vmem:[%s361 + $0x4] sm:$0xf]
        %v444 = vld [vmem:[%s361 + $0x8] sm:$0xf]
        %v445 = vld [vmem:[%s361 + $0xc] sm:$0xf]
        %v446 = vpack.c.bf16 %v437, %v437
        %448 = vrot.lane.b32.xlu0 %v446, 96
        %v449 = vpop.permute.xlu0 %448
        %vm450 = vcmask 64512
        %v452 = vsel %vm450, %v446, 0
        %v455 = vsel %vm450, %v449, 0
        %457 = vmatprep.subr.bf16.mxu0 0
        %458 = vmatpush1.bf16.xpose.msra.mxu0 %v455
        %459 = vmatprep.subr.bf16.mxu0 0
        %460 = vmatpush1.bf16.xpose.msra.mxu0 0
        %461 = vmatprep.subr.bf16.mxu0 0
        %462 = vmatpush1.bf16.xpose.msra.mxu0 0
        %463 = vmatprep.subr.bf16.mxu0 0
        %464 = vmatpush1.bf16.xpose.msra.mxu0 0
        %465 = vmatprep.subr.bf16.mxu0 0
        %466 = vmatpush1.bf16.xpose.msra.mxu0 0
        %467 = vmatprep.subr.bf16.mxu0 0
        %468 = vmatpush1.bf16.xpose.msra.mxu0 0
        %469 = vmatprep.subr.bf16.mxu0 0
        %470 = vmatpush1.bf16.xpose.msra.mxu0 0
        %471 = vmatprep.subr.bf16.mxu0 0
        %472 = vmatpush1.bf16.xpose.msra.mxu0 0
        %473 = vmatprep.subr.bf16.mxu0 0
        %474 = vmatpush1.bf16.xpose.msra.mxu0 0
        %475 = vmatprep.subr.bf16.mxu0 0
        %476 = vmatpush1.bf16.xpose.msra.mxu0 0
        %477 = vmatprep.subr.bf16.mxu0 0
        %478 = vmatpush1.bf16.xpose.msra.mxu0 0
        %479 = vmatprep.subr.bf16.mxu0 0
        %480 = vmatpush1.bf16.xpose.msra.mxu0 0
        %481 = vmatprep.subr.bf16.mxu0 0
        %482 = vmatpush1.bf16.xpose.msra.mxu0 0
        %483 = vmatprep.subr.bf16.mxu0 0
        %484 = vmatpush1.bf16.xpose.msra.mxu0 0
        %485 = vmatprep.subr.bf16.mxu0 0
        %486 = vmatpush1.bf16.xpose.msra.mxu0 0
        %487 = vmatprep.subr.bf16.mxu0 0
        %488 = vmatpush1.bf16.xpose.msra.mxu0 0
        %489 = vmatprep.mubr.bf16.mxu0 0
        %490 = vmatmul.mubr.bf16.gmra.mrb[0].mxu0 %v452
        %v491 = vpop.f32.mrb[0].mxu0
        %v492 = vadd.f32 0.0, %v491
        %v493 = vpop.f32.mrb[0].mxu0
        %v494 = vpop.f32.mrb[0].mxu0
        %v495 = vpop.f32.mrb[0].mxu0
        %496 = vdwg.mxu0
        %v497 = vmul.f32 %v492, 0.35355338
        %v498 = vsel %vm450, %v497, -inf
        %499 = vmax.xlane.f32.xlu0 %v498
        %v500 = vpop.xlane.xlu0 %499
        %v501 = vsub.f32 %v497, %v500
        %v502 = vmul.f32 %v501, 1.442695
        %v503 = vpow.pop %v502
        %v504 = vsel %vm450, %v503, 0.0
        %505 = vadd.xlane.f32.xlu0 %v504
        %v506 = vpop.xlane.xlu0 %505
        %v507 = vrcp.pop %v506
        %v508 = vmul.f32 %v503, %v507
        %509 = vst.msk [vmem:[%s351] sm:$0xff] %vm450, %v508
        %v510 = vpack.c.bf16 %v508, %v508
        %511 = vrot.lane.b32.xlu0 %v446, 64
        %v512 = vpop.permute.xlu0 %511
        %v514 = vsel %vm450, %v510, 0
        %vm516 = vcmask 1043456
        %v518 = vsel %vm516, %v512, 0
        %520 = vmatprep.subr.bf16.mxu0 0
        %521 = vmatpush1.bf16.msra.mxu0 %v518
        %522 = vmatprep.subr.bf16.mxu0 0
        %523 = vmatpush1.bf16.msra.mxu0 0
        %524 = vmatprep.subr.bf16.mxu0 0
        %525 = vmatpush1.bf16.msra.mxu0 0
        %526 = vmatprep.subr.bf16.mxu0 0
        %527 = vmatpush1.bf16.msra.mxu0 0
        %528 = vmatprep.subr.bf16.mxu0 0
        %529 = vmatpush1.bf16.msra.mxu0 0
        %530 = vmatprep.subr.bf16.mxu0 0
        %531 = vmatpush1.bf16.msra.mxu0 0
        %532 = vmatprep.subr.bf16.mxu0 0
        %533 = vmatpush1.bf16.msra.mxu0 0
        %534 = vmatprep.subr.bf16.mxu0 0
        %535 = vmatpush1.bf16.msra.mxu0 0
        %536 = vmatprep.subr.bf16.mxu0 0
        %537 = vmatpush1.bf16.msra.mxu0 0
        %538 = vmatprep.subr.bf16.mxu0 0
        %539 = vmatpush1.bf16.msra.mxu0 0
        %540 = vmatprep.subr.bf16.mxu0 0
        %541 = vmatpush1.bf16.msra.mxu0 0
        %542 = vmatprep.subr.bf16.mxu0 0
        %543 = vmatpush1.bf16.msra.mxu0 0
        %544 = vmatprep.subr.bf16.mxu0 0
        %545 = vmatpush1.bf16.msra.mxu0 0
        %546 = vmatprep.subr.bf16.mxu0 0
        %547 = vmatpush1.bf16.msra.mxu0 0
        %548 = vmatprep.subr.bf16.mxu0 0
        %549 = vmatpush1.bf16.msra.mxu0 0
        %550 = vmatprep.subr.bf16.mxu0 0
        %551 = vmatpush1.bf16.msra.mxu0 0
        %552 = vmatprep.mubr.bf16.mxu0 0
        %553 = vmatmul.mubr.bf16.gmra.mrb[0].mxu0 %v514
        %v554 = vpop.f32.mrb[0].mxu0
        %v555 = vadd.f32 0.0, %v554
        %v556 = vpop.f32.mrb[0].mxu0
        %v557 = vpop.f32.mrb[0].mxu0
        %v558 = vpop.f32.mrb[0].mxu0
        %559 = vdwg.mxu0
        %v560 = vpack.c.bf16 %v555, %v555
        %561 = vrot.lane.b32.xlu0 %v446, 120
        %v562 = vpop.permute.xlu0 %561
        %563 = vrot.lane.b32.xlu0 %v446, 88
        %v564 = vpop.permute.xlu0 %563
        %v566 = vsel %vm450, %v562, 0
        %v569 = vsel %vm450, %v564, 0
        %571 = vmatprep.subr.bf16.mxu0 0
        %572 = vmatpush1.bf16.xpose.msra.mxu0 %v569
        %573 = vmatprep.subr.bf16.mxu0 0
        %574 = vmatpush1.bf16.xpose.msra.mxu0 0
        %575 = vmatprep.subr.bf16.mxu0 0
        %576 = vmatpush1.bf16.xpose.msra.mxu0 0
        %577 = vmatprep.subr.bf16.mxu0 0
        %578 = vmatpush1.bf16.xpose.msra.mxu0 0
        %579 = vmatprep.subr.bf16.mxu0 0
        %580 = vmatpush1.bf16.xpose.msra.mxu0 0
        %581 = vmatprep.subr.bf16.mxu0 0
        %582 = vmatpush1.bf16.xpose.msra.mxu0 0
        %583 = vmatprep.subr.bf16.mxu0 0
        %584 = vmatpush1.bf16.xpose.msra.mxu0 0
        %585 = vmatprep.subr.bf16.mxu0 0
        %586 = vmatpush1.bf16.xpose.msra.mxu0 0
        %587 = vmatprep.subr.bf16.mxu0 0
        %588 = vmatpush1.bf16.xpose.msra.mxu0 0
        %589 = vmatprep.subr.bf16.mxu0 0
        %590 = vmatpush1.bf16.xpose.msra.mxu0 0
        %591 = vmatprep.subr.bf16.mxu0 0
        %592 = vmatpush1.bf16.xpose.msra.mxu0 0
        %593 = vmatprep.subr.bf16.mxu0 0
        %594 = vmatpush1.bf16.xpose.msra.mxu0 0
        %595 = vmatprep.subr.bf16.mxu0 0
        %596 = vmatpush1.bf16.xpose.msra.mxu0 0
        %597 = vmatprep.subr.bf16.mxu0 0
        %598 = vmatpush1.bf16.xpose.msra.mxu0 0
        %599 = vmatprep.subr.bf16.mxu0 0
        %600 = vmatpush1.bf16.xpose.msra.mxu0 0
        %601 = vmatprep.subr.bf16.mxu0 0
        %602 = vmatpush1.bf16.xpose.msra.mxu0 0
        %603 = vmatprep.mubr.bf16.mxu0 0
        %604 = vmatmul.mubr.bf16.gmra.mrb[0].mxu0 %v566
        %v605 = vpop.f32.mrb[0].mxu0
        %v606 = vadd.f32 0.0, %v605
        %v607 = vpop.f32.mrb[0].mxu0
        %v608 = vpop.f32.mrb[0].mxu0
        %v609 = vpop.f32.mrb[0].mxu0
        %610 = vdwg.mxu0
        %v611 = vmul.f32 %v606, 0.35355338
        %v612 = vsel %vm450, %v611, -inf
        %613 = vmax.xlane.f32.xlu0 %v612
        %v614 = vpop.xlane.xlu0 %613
        %v615 = vsub.f32 %v611, %v614
        %v616 = vmul.f32 %v615, 1.442695
        %v617 = vpow.pop %v616
        %v618 = vsel %vm450, %v617, 0.0
        %619 = vadd.xlane.f32.xlu0 %v618
        %v620 = vpop.xlane.xlu0 %619
        %v621 = vrcp.pop %v620
        %v622 = vmul.f32 %v617, %v621
        %624 = vrot.lane.b32.xlu0 %v622, 8
        %v625 = vpop.permute.xlu0 %624
        %vm627 = vcmask 130112
        %628 = vst.msk [vmem:[%s351] sm:$0xff] %vm627, %v625
        %v629 = vpack.c.bf16 %v622, %v622
        %630 = vrot.lane.b32.xlu0 %v446, 56
        %v631 = vpop.permute.xlu0 %630
        %v633 = vsel %vm450, %v629, 0
        %v636 = vsel %vm516, %v631, 0
        %638 = vmatprep.subr.bf16.mxu0 0
        %639 = vmatpush1.bf16.msra.mxu0 %v636
        %640 = vmatprep.subr.bf16.mxu0 0
        %641 = vmatpush1.bf16.msra.mxu0 0
        %642 = vmatprep.subr.bf16.mxu0 0
        %643 = vmatpush1.bf16.msra.mxu0 0
        %644 = vmatprep.subr.bf16.mxu0 0
        %645 = vmatpush1.bf16.msra.mxu0 0
        %646 = vmatprep.subr.bf16.mxu0 0
        %647 = vmatpush1.bf16.msra.mxu0 0
        %648 = vmatprep.subr.bf16.mxu0 0
        %649 = vmatpush1.bf16.msra.mxu0 0
        %650 = vmatprep.subr.bf16.mxu0 0
        %651 = vmatpush1.bf16.msra.mxu0 0
        %652 = vmatprep.subr.bf16.mxu0 0
        %653 = vmatpush1.bf16.msra.mxu0 0
        %654 = vmatprep.subr.bf16.mxu0 0
        %655 = vmatpush1.bf16.msra.mxu0 0
        %656 = vmatprep.subr.bf16.mxu0 0
        %657 = vmatpush1.bf16.msra.mxu0 0
        %658 = vmatprep.subr.bf16.mxu0 0
        %659 = vmatpush1.bf16.msra.mxu0 0
        %660 = vmatprep.subr.bf16.mxu0 0
        %661 = vmatpush1.bf16.msra.mxu0 0
        %662 = vmatprep.subr.bf16.mxu0 0
        %663 = vmatpush1.bf16.msra.mxu0 0
        %664 = vmatprep.subr.bf16.mxu0 0
        %665 = vmatpush1.bf16.msra.mxu0 0
        %666 = vmatprep.subr.bf16.mxu0 0
        %667 = vmatpush1.bf16.msra.mxu0 0
        %668 = vmatprep.subr.bf16.mxu0 0
        %669 = vmatpush1.bf16.msra.mxu0 0
        %670 = vmatprep.mubr.bf16.mxu0 0
        %671 = vmatmul.mubr.bf16.gmra.mrb[0].mxu0 %v633
        %v672 = vpop.f32.mrb[0].mxu0
        %v673 = vadd.f32 0.0, %v672
        %v674 = vpop.f32.mrb[0].mxu0
        %v675 = vpop.f32.mrb[0].mxu0
        %v676 = vpop.f32.mrb[0].mxu0
        %677 = vdwg.mxu0
        %v678 = vpack.c.bf16 %v673, %v673
        %v680 = vsel %vm450, %v678, 0
        %v683 = vsel %vm516, %v443, 0
        %685 = vmatprep.subr.bf16.mxu0 0
        %686 = vmatpush1.bf16.msra.mxu0 %v683
        %687 = vmatprep.subr.bf16.mxu0 0
        %688 = vmatpush1.bf16.msra.mxu0 0
        %689 = vmatprep.subr.bf16.mxu0 0
        %690 = vmatpush1.bf16.msra.mxu0 0
        %691 = vmatprep.subr.bf16.mxu0 0
        %692 = vmatpush1.bf16.msra.mxu0 0
        %693 = vmatprep.subr.bf16.mxu0 0
        %694 = vmatpush1.bf16.msra.mxu0 0
        %695 = vmatprep.subr.bf16.mxu0 0
        %696 = vmatpush1.bf16.msra.mxu0 0
        %697 = vmatprep.subr.bf16.mxu0 0
        %698 = vmatpush1.bf16.msra.mxu0 0
        %699 = vmatprep.subr.bf16.mxu0 0
        %700 = vmatpush1.bf16.msra.mxu0 0
        %701 = vmatprep.subr.bf16.mxu0 0
        %702 = vmatpush1.bf16.msra.mxu0 0
        %703 = vmatprep.subr.bf16.mxu0 0
        %704 = vmatpush1.bf16.msra.mxu0 0
        %705 = vmatprep.subr.bf16.mxu0 0
        %706 = vmatpush1.bf16.msra.mxu0 0
        %707 = vmatprep.subr.bf16.mxu0 0
        %708 = vmatpush1.bf16.msra.mxu0 0
        %709 = vmatprep.subr.bf16.mxu0 0
        %710 = vmatpush1.bf16.msra.mxu0 0
        %711 = vmatprep.subr.bf16.mxu0 0
        %712 = vmatpush1.bf16.msra.mxu0 0
        %713 = vmatprep.subr.bf16.mxu0 0
        %714 = vmatpush1.bf16.msra.mxu0 0
        %715 = vmatprep.subr.bf16.mxu0 0
        %716 = vmatpush1.bf16.msra.mxu0 0
        %717 = vmatprep.mubr.bf16.mxu0 0
        %718 = vmatmul.mubr.bf16.gmra.mrb[0].mxu0 %v680
        %v719 = vpop.f32.mrb[0].mxu0
        %v720 = vadd.f32 0.0, %v719
        %v721 = vpop.f32.mrb[0].mxu0
        %v722 = vpop.f32.mrb[0].mxu0
        %v723 = vpop.f32.mrb[0].mxu0
        %724 = vdwg.mxu0
        %v726 = vsel %vm450, %v560, 0
        %v729 = vsel %vm516, %v442, 0
        %731 = vmatprep.subr.bf16.mxu0 0
        %732 = vmatpush1.bf16.msra.mxu0 %v729
        %733 = vmatprep.subr.bf16.mxu0 0
        %734 = vmatpush1.bf16.msra.mxu0 0
        %735 = vmatprep.subr.bf16.mxu0 0
        %736 = vmatpush1.bf16.msra.mxu0 0
        %737 = vmatprep.subr.bf16.mxu0 0
        %738 = vmatpush1.bf16.msra.mxu0 0
        %739 = vmatprep.subr.bf16.mxu0 0
        %740 = vmatpush1.bf16.msra.mxu0 0
        %741 = vmatprep.subr.bf16.mxu0 0
        %742 = vmatpush1.bf16.msra.mxu0 0
        %743 = vmatprep.subr.bf16.mxu0 0
        %744 = vmatpush1.bf16.msra.mxu0 0
        %745 = vmatprep.subr.bf16.mxu0 0
        %746 = vmatpush1.bf16.msra.mxu0 0
        %747 = vmatprep.subr.bf16.mxu0 0
        %748 = vmatpush1.bf16.msra.mxu0 0
        %749 = vmatprep.subr.bf16.mxu0 0
        %750 = vmatpush1.bf16.msra.mxu0 0
        %751 = vmatprep.subr.bf16.mxu0 0
        %752 = vmatpush1.bf16.msra.mxu0 0
        %753 = vmatprep.subr.bf16.mxu0 0
        %754 = vmatpush1.bf16.msra.mxu0 0
        %755 = vmatprep.subr.bf16.mxu0 0
        %756 = vmatpush1.bf16.msra.mxu0 0
        %757 = vmatprep.subr.bf16.mxu0 0
        %758 = vmatpush1.bf16.msra.mxu0 0
        %759 = vmatprep.subr.bf16.mxu0 0
        %760 = vmatpush1.bf16.msra.mxu0 0
        %761 = vmatprep.subr.bf16.mxu0 0
        %762 = vmatpush1.bf16.msra.mxu0 0
        %763 = vmatprep.mubr.bf16.mxu0 0
        %764 = vmatmul.mubr.bf16.gmra.mrb[0].mxu0 %v726
        %v765 = vpop.f32.mrb[0].mxu0
        %v766 = vadd.f32 %v720, %v765
        %v767 = vpop.f32.mrb[0].mxu0
        %v768 = vpop.f32.mrb[0].mxu0
        %v769 = vpop.f32.mrb[0].mxu0
        %770 = vdwg.mxu0
        %771 = vrot.lane.b32.xlu0 %v446, 112
        %v772 = vpop.permute.xlu0 %771
        %773 = vrot.lane.b32.xlu0 %v446, 80
        %v774 = vpop.permute.xlu0 %773
        %v776 = vsel %vm450, %v772, 0
        %v779 = vsel %vm450, %v774, 0
        %781 = vmatprep.subr.bf16.mxu0 0
        %782 = vmatpush1.bf16.xpose.msra.mxu0 %v779
        %783 = vmatprep.subr.bf16.mxu0 0
        %784 = vmatpush1.bf16.xpose.msra.mxu0 0
        %785 = vmatprep.subr.bf16.mxu0 0
        %786 = vmatpush1.bf16.xpose.msra.mxu0 0
        %787 = vmatprep.subr.bf16.mxu0 0
        %788 = vmatpush1.bf16.xpose.msra.mxu0 0
        %789 = vmatprep.subr.bf16.mxu0 0
        %790 = vmatpush1.bf16.xpose.msra.mxu0 0
        %791 = vmatprep.subr.bf16.mxu0 0
        %792 = vmatpush1.bf16.xpose.msra.mxu0 0
        %793 = vmatprep.subr.bf16.mxu0 0
        %794 = vmatpush1.bf16.xpose.msra.mxu0 0
        %795 = vmatprep.subr.bf16.mxu0 0
        %796 = vmatpush1.bf16.xpose.msra.mxu0 0
        %797 = vmatprep.subr.bf16.mxu0 0
        %798 = vmatpush1.bf16.xpose.msra.mxu0 0
        %799 = vmatprep.subr.bf16.mxu0 0
        %800 = vmatpush1.bf16.xpose.msra.mxu0 0
        %801 = vmatprep.subr.bf16.mxu0 0
        %802 = vmatpush1.bf16.xpose.msra.mxu0 0
        %803 = vmatprep.subr.bf16.mxu0 0
        %804 = vmatpush1.bf16.xpose.msra.mxu0 0
        %805 = vmatprep.subr.bf16.mxu0 0
        %806 = vmatpush1.bf16.xpose.msra.mxu0 0
        %807 = vmatprep.subr.bf16.mxu0 0
        %808 = vmatpush1.bf16.xpose.msra.mxu0 0
        %809 = vmatprep.subr.bf16.mxu0 0
        %810 = vmatpush1.bf16.xpose.msra.mxu0 0
        %811 = vmatprep.subr.bf16.mxu0 0
        %812 = vmatpush1.bf16.xpose.msra.mxu0 0
        %813 = vmatprep.mubr.bf16.mxu0 0
        %814 = vmatmul.mubr.bf16.gmra.mrb[0].mxu0 %v776
        %v815 = vpop.f32.mrb[0].mxu0
        %v816 = vadd.f32 0.0, %v815
        %v817 = vpop.f32.mrb[0].mxu0
        %v818 = vpop.f32.mrb[0].mxu0
        %v819 = vpop.f32.mrb[0].mxu0
        %820 = vdwg.mxu0
        %v821 = vmul.f32 %v816, 0.35355338
        %v822 = vsel %vm450, %v821, -inf
        %823 = vmax.xlane.f32.xlu0 %v822
        %v824 = vpop.xlane.xlu0 %823
        %v825 = vsub.f32 %v821, %v824
        %v826 = vmul.f32 %v825, 1.442695
        %v827 = vpow.pop %v826
        %v828 = vsel %vm450, %v827, 0.0
        %829 = vadd.xlane.f32.xlu0 %v828
        %v830 = vpop.xlane.xlu0 %829
        %v831 = vrcp.pop %v830
        %v832 = vmul.f32 %v827, %v831
        %834 = vrot.lane.b32.xlu0 %v832, 16
        %v835 = vpop.permute.xlu0 %834
        %vm837 = vcmask 195712
        %838 = vst.msk [vmem:[%s351] sm:$0xff] %vm837, %v835
        %v839 = vpack.c.bf16 %v832, %v832
        %840 = vrot.lane.b32.xlu0 %v446, 48
        %v841 = vpop.permute.xlu0 %840
        %v843 = vsel %vm450, %v839, 0
        %v846 = vsel %vm516, %v841, 0
        %848 = vmatprep.subr.bf16.mxu0 0
        %849 = vmatpush1.bf16.msra.mxu0 %v846
        %850 = vmatprep.subr.bf16.mxu0 0
        %851 = vmatpush1.bf16.msra.mxu0 0
        %852 = vmatprep.subr.bf16.mxu0 0
        %853 = vmatpush1.bf16.msra.mxu0 0
        %854 = vmatprep.subr.bf16.mxu0 0
        %855 = vmatpush1.bf16.msra.mxu0 0
        %856 = vmatprep.subr.bf16.mxu0 0
        %857 = vmatpush1.bf16.msra.mxu0 0
        %858 = vmatprep.subr.bf16.mxu0 0
        %859 = vmatpush1.bf16.msra.mxu0 0
        %860 = vmatprep.subr.bf16.mxu0 0
        %861 = vmatpush1.bf16.msra.mxu0 0
        %862 = vmatprep.subr.bf16.mxu0 0
        %863 = vmatpush1.bf16.msra.mxu0 0
        %864 = vmatprep.subr.bf16.mxu0 0
        %865 = vmatpush1.bf16.msra.mxu0 0
        %866 = vmatprep.subr.bf16.mxu0 0
        %867 = vmatpush1.bf16.msra.mxu0 0
        %868 = vmatprep.subr.bf16.mxu0 0
        %869 = vmatpush1.bf16.msra.mxu0 0
        %870 = vmatprep.subr.bf16.mxu0 0
        %871 = vmatpush1.bf16.msra.mxu0 0
        %872 = vmatprep.subr.bf16.mxu0 0
        %873 = vmatpush1.bf16.msra.mxu0 0
        %874 = vmatprep.subr.bf16.mxu0 0
        %875 = vmatpush1.bf16.msra.mxu0 0
        %876 = vmatprep.subr.bf16.mxu0 0
        %877 = vmatpush1.bf16.msra.mxu0 0
        %878 = vmatprep.subr.bf16.mxu0 0
        %879 = vmatpush1.bf16.msra.mxu0 0
        %880 = vmatprep.mubr.bf16.mxu0 0
        %881 = vmatmul.mubr.bf16.gmra.mrb[0].mxu0 %v843
        %v882 = vpop.f32.mrb[0].mxu0
        %v883 = vadd.f32 0.0, %v882
        %v884 = vpop.f32.mrb[0].mxu0
        %v885 = vpop.f32.mrb[0].mxu0
        %v886 = vpop.f32.mrb[0].mxu0
        %887 = vdwg.mxu0
        %v888 = vpack.c.bf16 %v883, %v883
        %v890 = vsel %vm450, %v888, 0
        %v893 = vsel %vm516, %v444, 0
        %895 = vmatprep.subr.bf16.mxu0 0
        %896 = vmatpush1.bf16.msra.mxu0 %v893
        %897 = vmatprep.subr.bf16.mxu0 0
        %898 = vmatpush1.bf16.msra.mxu0 0
        %899 = vmatprep.subr.bf16.mxu0 0
        %900 = vmatpush1.bf16.msra.mxu0 0
        %901 = vmatprep.subr.bf16.mxu0 0
        %902 = vmatpush1.bf16.msra.mxu0 0
        %903 = vmatprep.subr.bf16.mxu0 0
        %904 = vmatpush1.bf16.msra.mxu0 0
        %905 = vmatprep.subr.bf16.mxu0 0
        %906 = vmatpush1.bf16.msra.mxu0 0
        %907 = vmatprep.subr.bf16.mxu0 0
        %908 = vmatpush1.bf16.msra.mxu0 0
        %909 = vmatprep.subr.bf16.mxu0 0
        %910 = vmatpush1.bf16.msra.mxu0 0
        %911 = vmatprep.subr.bf16.mxu0 0
        %912 = vmatpush1.bf16.msra.mxu0 0
        %913 = vmatprep.subr.bf16.mxu0 0
        %914 = vmatpush1.bf16.msra.mxu0 0
        %915 = vmatprep.subr.bf16.mxu0 0
        %916 = vmatpush1.bf16.msra.mxu0 0
        %917 = vmatprep.subr.bf16.mxu0 0
        %918 = vmatpush1.bf16.msra.mxu0 0
        %919 = vmatprep.subr.bf16.mxu0 0
        %920 = vmatpush1.bf16.msra.mxu0 0
        %921 = vmatprep.subr.bf16.mxu0 0
        %922 = vmatpush1.bf16.msra.mxu0 0
        %923 = vmatprep.subr.bf16.mxu0 0
        %924 = vmatpush1.bf16.msra.mxu0 0
        %925 = vmatprep.subr.bf16.mxu0 0
        %926 = vmatpush1.bf16.msra.mxu0 0
        %927 = vmatprep.mubr.bf16.mxu0 0
        %928 = vmatmul.mubr.bf16.gmra.mrb[0].mxu0 %v890
        %v929 = vpop.f32.mrb[0].mxu0
        %v930 = vadd.f32 0.0, %v929
        %v931 = vpop.f32.mrb[0].mxu0
        %v932 = vpop.f32.mrb[0].mxu0
        %v933 = vpop.f32.mrb[0].mxu0
        %934 = vdwg.mxu0
        %v935 = vadd.f32 %v766, %v930
        %936 = vrot.lane.b32.xlu0 %v446, 104
        %v937 = vpop.permute.xlu0 %936
        %938 = vrot.lane.b32.xlu0 %v446, 72
        %v939 = vpop.permute.xlu0 %938
        %v941 = vsel %vm450, %v937, 0
        %v944 = vsel %vm450, %v939, 0
        %946 = vmatprep.subr.bf16.mxu0 0
        %947 = vmatpush1.bf16.xpose.msra.mxu0 %v944
        %948 = vmatprep.subr.bf16.mxu0 0
        %949 = vmatpush1.bf16.xpose.msra.mxu0 0
        %950 = vmatprep.subr.bf16.mxu0 0
        %951 = vmatpush1.bf16.xpose.msra.mxu0 0
        %952 = vmatprep.subr.bf16.mxu0 0
        %953 = vmatpush1.bf16.xpose.msra.mxu0 0
        %954 = vmatprep.subr.bf16.mxu0 0
        %955 = vmatpush1.bf16.xpose.msra.mxu0 0
        %956 = vmatprep.subr.bf16.mxu0 0
        %957 = vmatpush1.bf16.xpose.msra.mxu0 0
        %958 = vmatprep.subr.bf16.mxu0 0
        %959 = vmatpush1.bf16.xpose.msra.mxu0 0
        %960 = vmatprep.subr.bf16.mxu0 0
        %961 = vmatpush1.bf16.xpose.msra.mxu0 0
        %962 = vmatprep.subr.bf16.mxu0 0
        %963 = vmatpush1.bf16.xpose.msra.mxu0 0
        %964 = vmatprep.subr.bf16.mxu0 0
        %965 = vmatpush1.bf16.xpose.msra.mxu0 0
        %966 = vmatprep.subr.bf16.mxu0 0
        %967 = vmatpush1.bf16.xpose.msra.mxu0 0
        %968 = vmatprep.subr.bf16.mxu0 0
        %969 = vmatpush1.bf16.xpose.msra.mxu0 0
        %970 = vmatprep.subr.bf16.mxu0 0
        %971 = vmatpush1.bf16.xpose.msra.mxu0 0
        %972 = vmatprep.subr.bf16.mxu0 0
        %973 = vmatpush1.bf16.xpose.msra.mxu0 0
        %974 = vmatprep.subr.bf16.mxu0 0
        %975 = vmatpush1.bf16.xpose.msra.mxu0 0
        %976 = vmatprep.subr.bf16.mxu0 0
        %977 = vmatpush1.bf16.xpose.msra.mxu0 0
        %978 = vmatprep.mubr.bf16.mxu0 0
        %979 = vmatmul.mubr.bf16.gmra.mrb[0].mxu0 %v941
        %v980 = vpop.f32.mrb[0].mxu0
        %v981 = vadd.f32 0.0, %v980
        %v982 = vpop.f32.mrb[0].mxu0
        %v983 = vpop.f32.mrb[0].mxu0
        %v984 = vpop.f32.mrb[0].mxu0
        %985 = vdwg.mxu0
        %v986 = vmul.f32 %v981, 0.35355338
        %v987 = vsel %vm450, %v986, -inf
        %988 = vmax.xlane.f32.xlu0 %v987
        %v989 = vpop.xlane.xlu0 %988
        %v990 = vsub.f32 %v986, %v989
        %v991 = vmul.f32 %v990, 1.442695
        %v992 = vpow.pop %v991
        %v993 = vsel %vm450, %v992, 0.0
        %994 = vadd.xlane.f32.xlu0 %v993
        %v995 = vpop.xlane.xlu0 %994
        %v996 = vrcp.pop %v995
        %v997 = vmul.f32 %v992, %v996
        %999 = vrot.lane.b32.xlu0 %v997, 24
        %v1000 = vpop.permute.xlu0 %999
        %vm1002 = vcmask 261312
        %1003 = vst.msk [vmem:[%s351] sm:$0xff] %vm1002, %v1000
        %v1004 = vpack.c.bf16 %v997, %v997
        %1005 = vrot.lane.b32.xlu0 %v446, 40
        %v1006 = vpop.permute.xlu0 %1005
        %v1008 = vsel %vm450, %v1004, 0
        %v1011 = vsel %vm516, %v1006, 0
        %1013 = vmatprep.subr.bf16.mxu0 0
        %1014 = vmatpush1.bf16.msra.mxu0 %v1011
        %1015 = vmatprep.subr.bf16.mxu0 0
        %1016 = vmatpush1.bf16.msra.mxu0 0
        %1017 = vmatprep.subr.bf16.mxu0 0
        %1018 = vmatpush1.bf16.msra.mxu0 0
        %1019 = vmatprep.subr.bf16.mxu0 0
        %1020 = vmatpush1.bf16.msra.mxu0 0
        %1021 = vmatprep.subr.bf16.mxu0 0
        %1022 = vmatpush1.bf16.msra.mxu0 0
        %1023 = vmatprep.subr.bf16.mxu0 0
        %1024 = vmatpush1.bf16.msra.mxu0 0
        %1025 = vmatprep.subr.bf16.mxu0 0
        %1026 = vmatpush1.bf16.msra.mxu0 0
        %1027 = vmatprep.subr.bf16.mxu0 0
        %1028 = vmatpush1.bf16.msra.mxu0 0
        %1029 = vmatprep.subr.bf16.mxu0 0
        %1030 = vmatpush1.bf16.msra.mxu0 0
        %1031 = vmatprep.subr.bf16.mxu0 0
        %1032 = vmatpush1.bf16.msra.mxu0 0
        %1033 = vmatprep.subr.bf16.mxu0 0
        %1034 = vmatpush1.bf16.msra.mxu0 0
        %1035 = vmatprep.subr.bf16.mxu0 0
        %1036 = vmatpush1.bf16.msra.mxu0 0
        %1037 = vmatprep.subr.bf16.mxu0 0
        %1038 = vmatpush1.bf16.msra.mxu0 0
        %1039 = vmatprep.subr.bf16.mxu0 0
        %1040 = vmatpush1.bf16.msra.mxu0 0
        %1041 = vmatprep.subr.bf16.mxu0 0
        %1042 = vmatpush1.bf16.msra.mxu0 0
        %1043 = vmatprep.subr.bf16.mxu0 0
        %1044 = vmatpush1.bf16.msra.mxu0 0
        %1045 = vmatprep.mubr.bf16.mxu0 0
        %1046 = vmatmul.mubr.bf16.gmra.mrb[0].mxu0 %v1008
        %v1047 = vpop.f32.mrb[0].mxu0
        %v1048 = vadd.f32 0.0, %v1047
        %v1049 = vpop.f32.mrb[0].mxu0
        %v1050 = vpop.f32.mrb[0].mxu0
        %v1051 = vpop.f32.mrb[0].mxu0
        %1052 = vdwg.mxu0
        %v1053 = vpack.c.bf16 %v1048, %v1048
        %v1055 = vsel %vm450, %v1053, 0
        %v1058 = vsel %vm516, %v445, 0
        %1060 = vmatprep.subr.bf16.mxu0 0
        %1061 = vmatpush1.bf16.msra.mxu0 %v1058
        %1062 = vmatprep.subr.bf16.mxu0 0
        %1063 = vmatpush1.bf16.msra.mxu0 0
        %1064 = vmatprep.subr.bf16.mxu0 0
        %1065 = vmatpush1.bf16.msra.mxu0 0
        %1066 = vmatprep.subr.bf16.mxu0 0
        %1067 = vmatpush1.bf16.msra.mxu0 0
        %1068 = vmatprep.subr.bf16.mxu0 0
        %1069 = vmatpush1.bf16.msra.mxu0 0
        %1070 = vmatprep.subr.bf16.mxu0 0
        %1071 = vmatpush1.bf16.msra.mxu0 0
        %1072 = vmatprep.subr.bf16.mxu0 0
        %1073 = vmatpush1.bf16.msra.mxu0 0
        %1074 = vmatprep.subr.bf16.mxu0 0
        %1075 = vmatpush1.bf16.msra.mxu0 0
        %1076 = vmatprep.subr.bf16.mxu0 0
        %1077 = vmatpush1.bf16.msra.mxu0 0
        %1078 = vmatprep.subr.bf16.mxu0 0
        %1079 = vmatpush1.bf16.msra.mxu0 0
        %1080 = vmatprep.subr.bf16.mxu0 0
        %1081 = vmatpush1.bf16.msra.mxu0 0
        %1082 = vmatprep.subr.bf16.mxu0 0
        %1083 = vmatpush1.bf16.msra.mxu0 0
        %1084 = vmatprep.subr.bf16.mxu0 0
        %1085 = vmatpush1.bf16.msra.mxu0 0
        %1086 = vmatprep.subr.bf16.mxu0 0
        %1087 = vmatpush1.bf16.msra.mxu0 0
        %1088 = vmatprep.subr.bf16.mxu0 0
        %1089 = vmatpush1.bf16.msra.mxu0 0
        %1090 = vmatprep.subr.bf16.mxu0 0
        %1091 = vmatpush1.bf16.msra.mxu0 0
        %1092 = vmatprep.mubr.bf16.mxu0 0
        %1093 = vmatmul.mubr.bf16.gmra.mrb[0].mxu0 %v1055
        %v1094 = vpop.f32.mrb[0].mxu0
        %v1095 = vadd.f32 0.0, %v1094
        %v1096 = vpop.f32.mrb[0].mxu0
        %v1097 = vpop.f32.mrb[0].mxu0
        %v1098 = vpop.f32.mrb[0].mxu0
        %1099 = vdwg.mxu0
        %v1100 = vadd.f32 %v935, %v1095
        %v1101 = vadd.f32 %v1100, %v380
        %v1102 = vsel %vm398, %v1101, 0.0
        %1103 = vadd.xlane.f32.xlu0 %v1102
        %v1104 = vpop.xlane.xlu0 %1103
        %v1105 = vrcp.pop 32.0
        %v1106 = vmul.f32 %v1104, %v1105
        %v1107 = vsub.f32 %v1101, %v1106
        %v1108 = vmul.f32 %v1107, %v1107
        %v1109 = vsel %vm398, %v1108, 0.0
        %1110 = vadd.xlane.f32.xlu0 %v1109
        %v1111 = vpop.xlane.xlu0 %1110
        %v1112 = vmul.f32 %v1111, %v1105
        %v1113 = vadd.f32 %v1112, 1e-05
        %v1114 = vrsqrt.pop %v1113
        %v1115 = vmul.f32 %v1107, %v1114
        %v1116 = vpack.c.bf16 %v1115, %v1115
        %v1117 = vld [vmem:[%s366] sm:$0xf]
        %v1118 = vld [vmem:[%s366 + $0x4] sm:$0xf]
        %v1119 = vld [vmem:[%s366 + $0x8] sm:$0xf]
        %v1120 = vld [vmem:[%s366 + $0xc] sm:$0xf]
        %v1125 = vunpack.c.l.b16 %v1117
        %v1126 = vunpack.c.l.b16 %v1118
        %v1127 = vunpack.c.l.b16 %v1119
        %v1128 = vunpack.c.l.b16 %v1120
        %v1129 = vpack.c.b16 %v1126, %v1125
        %v1130 = vpack.c.b16 %v1128, %v1127
        %v1134 = vsel %vm398, %v1116, 0
        %1136 = vmatprep.subr.bf16.mxu0 0
        %1137 = vmatpush1.bf16.msra.mxu0 %v1129
        %1138 = vmatprep.subr.bf16.mxu0 0
        %1139 = vmatpush1.bf16.msra.mxu0 %v1130
        %1140 = vmatprep.subr.bf16.mxu0 0
        %1141 = vmatpush1.bf16.msra.mxu0 0
        %1142 = vmatprep.subr.bf16.mxu0 0
        %1143 = vmatpush1.bf16.msra.mxu0 0
        %1144 = vmatprep.subr.bf16.mxu0 0
        %1145 = vmatpush1.bf16.msra.mxu0 0
        %1146 = vmatprep.subr.bf16.mxu0 0
        %1147 = vmatpush1.bf16.msra.mxu0 0
        %1148 = vmatprep.subr.bf16.mxu0 0
        %1149 = vmatpush1.bf16.msra.mxu0 0
        %1150 = vmatprep.subr.bf16.mxu0 0
        %1151 = vmatpush1.bf16.msra.mxu0 0
        %1152 = vmatprep.subr.bf16.mxu0 0
        %1153 = vmatpush1.bf16.msra.mxu0 0
        %1154 = vmatprep.subr.bf16.mxu0 0
        %1155 = vmatpush1.bf16.msra.mxu0 0
        %1156 = vmatprep.subr.bf16.mxu0 0
        %1157 = vmatpush1.bf16.msra.mxu0 0
        %1158 = vmatprep.subr.bf16.mxu0 0
        %1159 = vmatpush1.bf16.msra.mxu0 0
        %1160 = vmatprep.subr.bf16.mxu0 0
        %1161 = vmatpush1.bf16.msra.mxu0 0
        %1162 = vmatprep.subr.bf16.mxu0 0
        %1163 = vmatpush1.bf16.msra.mxu0 0
        %1164 = vmatprep.subr.bf16.mxu0 0
        %1165 = vmatpush1.bf16.msra.mxu0 0
        %1166 = vmatprep.subr.bf16.mxu0 0
        %1167 = vmatpush1.bf16.msra.mxu0 0
        %1168 = vmatprep.mubr.bf16.mxu0 0
        %1169 = vmatmul.mubr.bf16.gmra.mrb[0].mxu0 %v1134
        %v1170 = vpop.f32.mrb[0].mxu0
        %v1171 = vadd.f32 0.0, %v1170
        %v1172 = vpop.f32.mrb[0].mxu0
        %v1173 = vpop.f32.mrb[0].mxu0
        %v1174 = vpop.f32.mrb[0].mxu0
        %1175 = vdwg.mxu0
        %v1176 = vmax.f32 %v1171, 0.0
        %v1177 = vpack.c.bf16 %v1176, %v1176
        %v1178 = vld [vmem:[%s371] sm:$0xf]
        %v1179 = vld [vmem:[%s371 + $0x4] sm:$0xf]
        %v1180 = vld [vmem:[%s371 + $0x8] sm:$0xf]
        %v1181 = vld [vmem:[%s371 + $0xc] sm:$0xf]
        %v1182 = vld [vmem:[%s371 + $0x10] sm:$0xf]
        %v1183 = vld [vmem:[%s371 + $0x14] sm:$0xf]
        %v1184 = vld [vmem:[%s371 + $0x18] sm:$0xf]
        %v1185 = vld [vmem:[%s371 + $0x1c] sm:$0xf]
        %v1194 = vunpack.c.l.b16 %v1178
        %v1195 = vunpack.c.l.b16 %v1179
        %v1196 = vunpack.c.l.b16 %v1180
        %v1197 = vunpack.c.l.b16 %v1181
        %v1198 = vunpack.c.l.b16 %v1182
        %v1199 = vunpack.c.l.b16 %v1183
        %v1200 = vunpack.c.l.b16 %v1184
        %v1201 = vunpack.c.l.b16 %v1185
        %v1202 = vpack.c.b16 %v1195, %v1194
        %v1203 = vpack.c.b16 %v1197, %v1196
        %v1204 = vpack.c.b16 %v1199, %v1198
        %v1205 = vpack.c.b16 %v1201, %v1200
        %vm1210 = vcmask 523264
        %v1212 = vsel %vm1210, %v1177, 0
        %1214 = vmatprep.subr.bf16.mxu0 0
        %1215 = vmatpush1.bf16.msra.mxu0 %v1202
        %1216 = vmatprep.subr.bf16.mxu0 0
        %1217 = vmatpush1.bf16.msra.mxu0 %v1203
        %1218 = vmatprep.subr.bf16.mxu0 0
        %1219 = vmatpush1.bf16.msra.mxu0 %v1204
        %1220 = vmatprep.subr.bf16.mxu0 0
        %1221 = vmatpush1.bf16.msra.mxu0 %v1205
        %1222 = vmatprep.subr.bf16.mxu0 0
        %1223 = vmatpush1.bf16.msra.mxu0 0
        %1224 = vmatprep.subr.bf16.mxu0 0
        %1225 = vmatpush1.bf16.msra.mxu0 0
        %1226 = vmatprep.subr.bf16.mxu0 0
        %1227 = vmatpush1.bf16.msra.mxu0 0
        %1228 = vmatprep.subr.bf16.mxu0 0
        %1229 = vmatpush1.bf16.msra.mxu0 0
        %1230 = vmatprep.subr.bf16.mxu0 0
        %1231 = vmatpush1.bf16.msra.mxu0 0
        %1232 = vmatprep.subr.bf16.mxu0 0
        %1233 = vmatpush1.bf16.msra.mxu0 0
        %1234 = vmatprep.subr.bf16.mxu0 0
        %1235 = vmatpush1.bf16.msra.mxu0 0
        %1236 = vmatprep.subr.bf16.mxu0 0
        %1237 = vmatpush1.bf16.msra.mxu0 0
        %1238 = vmatprep.subr.bf16.mxu0 0
        %1239 = vmatpush1.bf16.msra.mxu0 0
        %1240 = vmatprep.subr.bf16.mxu0 0
        %1241 = vmatpush1.bf16.msra.mxu0 0
        %1242 = vmatprep.subr.bf16.mxu0 0
        %1243 = vmatpush1.bf16.msra.mxu0 0
        %1244 = vmatprep.subr.bf16.mxu0 0
        %1245 = vmatpush1.bf16.msra.mxu0 0
        %1246 = vmatprep.mubr.bf16.mxu0 0
        %1247 = vmatmul.mubr.bf16.gmra.mrb[0].mxu0 %v1212
        %v1248 = vpop.f32.mrb[0].mxu0
        %v1249 = vadd.f32 %v1115, %v1248
        %v1250 = vpop.f32.mrb[0].mxu0
        %v1251 = vpop.f32.mrb[0].mxu0
        %v1252 = vpop.f32.mrb[0].mxu0
        %1253 = vdwg.mxu0
        %v1254 = vsel %vm398, %v1249, 0.0
        %1255 = vadd.xlane.f32.xlu0 %v1254
        %v1256 = vpop.xlane.xlu0 %1255
        %v1257 = vmul.f32 %v1256, %v1105
        %v1258 = vsub.f32 %v1249, %v1257
        %v1259 = vmul.f32 %v1258, %v1258
        %v1260 = vsel %vm398, %v1259, 0.0
        %1261 = vadd.xlane.f32.xlu0 %v1260
        %v1262 = vpop.xlane.xlu0 %1261
        %v1263 = vmul.f32 %v1262, %v1105
        %v1264 = vadd.f32 %v1263, 1e-05
        %v1265 = vrsqrt.pop %v1264
        %v1266 = vmul.f32 %v1258, %v1265
        %1267 = vst.msk [vmem:[#allocation2] sm:$0xff] %vm398, %v1266
        %p1268 = scmp.eq.s32.totalorder %s32, 1
        // Predicated region
        $region49: #{tpu_custom_call.1} parent=39 // pred_check
          %p1269 = pneg %p1268
        $region50: #{tpu_custom_call.1} parent=39 // pred_check_branch
          %1271 = sbr.rel (%p1269) target = $region52
        $region51: #{tpu_custom_call.1} parent=39 // pred_region
          %1272 = vst.msk [vmem:[%s344] sm:$0xff] %vm398, %v1266
        $region52: #{tpu_custom_call.1} parent=39 // pred_fallthru
          _
        %s1273 = sand.u32 %s177, 1
        %s1274 = scalar_lea.sflag [#allocation5], %s1273
        %s1275 = sand.u32 %s177, 1
        %s1276 = smul.addr %s1275, 8
        %s1277 = scalar_lea.vmem [#allocation6], %s1276
        %s1278 = sand.u32 %s205, 1
        %s1279 = scalar_lea.sflag [#allocation8], %s1278
        %s1280 = sand.u32 %s205, 1
        %s1281 = smul.addr %s1280, 8
        %s1282 = scalar_lea.vmem [#allocation7], %s1281
        // Predicated region
        $region53: #{tpu_custom_call.1} parent=39 // pred_check
          %p1283 = pneg %p187
        $region54: #{tpu_custom_call.1} parent=39 // pred_check_branch
          %1285 = sbr.rel (%p1283) target = $region56
        $region55: #{tpu_custom_call.1} parent=39 // pred_region
          %s1287 = ssub.s32 128, 128
          %1288 = vsyncadd %s1274, %s1287
          %s1289 = smul.addr %s31, 128
          %s1290 = scalar_lea.hbm %s5, %s1289
          %s1292 = sshll.u32 %s1277, 4
          %s1293 = int_to_ptr.vmem [resolvable:$true] %s1292
          %1295 = dma.vmem_to_hbm [thread:$0]  %s1293, 128, %s1290, %s1274
        $region56: #{tpu_custom_call.1} parent=39 // pred_fallthru
          _
        // Predicated region
        $region57: #{tpu_custom_call.1} parent=39 // pred_check
          %p1296 = pneg %p215
        $region58: #{tpu_custom_call.1} parent=39 // pred_check_branch
          %1298 = sbr.rel (%p1296) target = $region60
        $region59: #{tpu_custom_call.1} parent=39 // pred_region
          %s1300 = ssub.s32 128, 128
          %1301 = vsyncadd %s1279, %s1300
          %s1302 = smul.addr %s31, 2
          %s1303 = sadd.s32 %s32, %s1302
          %s1304 = smul.addr %s1303, 128
          %s1305 = scalar_lea.hbm %s6, %s1304
          %s1307 = sshll.u32 %s1282, 4
          %s1308 = int_to_ptr.vmem [resolvable:$true] %s1307
          %1310 = dma.vmem_to_hbm [thread:$0]  %s1308, 128, %s1305, %s1279
        $region60: #{tpu_custom_call.1} parent=39 // pred_fallthru
          _
      $region40: #{tpu_custom_call.1} parent=5 // pred_fallthru
        _
      %p1311 = scmp.le.s32.totalorder 2, %s22
      // Predicated region
      $region61: #{tpu_custom_call.1} parent=5 // pred_check
        %p1312 = pneg %p1311
      $region62: #{tpu_custom_call.1} parent=5 // pred_check_branch
        %1314 = sbr.rel (%p1312) target = $region64
      $region63: #{tpu_custom_call.1} parent=5 // pred_region
        %s1315 = ssub.s32 %s22, 2
        // Predicated region
        $region65: #{tpu_custom_call.1} parent=63 // pred_check
          %p1316 = pneg %p193
        $region66: #{tpu_custom_call.1} parent=63 // pred_check_branch
          %1318 = sbr.rel (%p1316) target = $region68
        $region67: #{tpu_custom_call.1} parent=63 // pred_region
          %s1319 = sand.u32 %s178, 1
          %s1320 = scalar_lea.sflag [#allocation5], %s1319
          %s1321 = sand.u32 %s178, 1
          %s1322 = smul.addr %s1321, 8
          %s1323 = scalar_lea.vmem [#allocation6], %s1322
          %1324 = dma.done %s1320, 128
        $region68: #{tpu_custom_call.1} parent=63 // pred_fallthru
          _
        // Predicated region
        $region69: #{tpu_custom_call.1} parent=63 // pred_check
          %p1325 = pneg %p221
        $region70: #{tpu_custom_call.1} parent=63 // pred_check_branch
          %1327 = sbr.rel (%p1325) target = $region72
        $region71: #{tpu_custom_call.1} parent=63 // pred_region
          %s1328 = sand.u32 %s206, 1
          %s1329 = scalar_lea.sflag [#allocation8], %s1328
          %s1330 = sand.u32 %s206, 1
          %s1331 = smul.addr %s1330, 8
          %s1332 = scalar_lea.vmem [#allocation7], %s1331
          %1333 = dma.done %s1329, 128
        $region72: #{tpu_custom_call.1} parent=63 // pred_fallthru
          _
      $region64: #{tpu_custom_call.1} parent=5 // pred_fallthru
        _
    $region6: #{tpu_custom_call.1} parent=1 // loop_footer
      %s26 = sadd.s32 1, %s22
    $region7: #{tpu_custom_call.1} parent=1 // loop_footer_branch
      %21 = sbr.rel target = $region3
    $region8: #{tpu_custom_call.1} parent=1 // loop_exit
      _
    %1334 = vsyncpa [#allocation4], 1
    %s1335 = scalar_lea.sflag [#allocation4], 1
    %1336 = vsyncpa %s1335, 1
    %1337 = vsyncpa [#allocation5], 1
    %s1338 = scalar_lea.sflag [#allocation5], 1
    %1339 = vsyncpa %s1338, 1
    %1340 = vsyncpa [#allocation8], 1
    %s1341 = scalar_lea.sflag [#allocation8], 1
    %1342 = vsyncpa %s1341, 1

</llo_original>
